<compile_context>
chip_gen: v7x
topology: tpu7x:2x2x1
jax: 0.10.0
libtpu: 0.0.40
codegen_flags: <defaults>
</compile_context>

<pallas_src>
import jax
import jax.numpy as jnp
import numpy as np
from jax import lax
from jax.experimental import pallas as pl
from jax.experimental.pallas import tpu as pltpu

# ----------------------------- configuration -------------------------------
B            = 8
NUM_FEATURES = 20
N_CATEGORIES = [5, 7, 3]
EMB_DIM      = 4
CAT_DIM      = EMB_DIM * len(N_CATEGORIES)
F_TOTAL      = NUM_FEATURES + CAT_DIM          # 32
HIDDEN       = 256                             # hidden_size
C1, C2, C3   = 16, 32, 32                      # channel_1 / channel_2 / channel_3
K1           = 5                               # kernel1
L1           = HIDDEN // C1                    # cha_1_reshape = 16
L2           = L1 // 2                         # cha_po_1      = 8
L3           = L2 // 2                         # after MaxPool1d(4, 2, 1) = 4
CHA_PO_2     = L3 * C3                         # 128
NUM_TARGETS  = 4
BN_EPS       = 1e-5
CELU_ALPHA   = 0.06
POOL_OFFSETS = (-1, 1, 2)                      # maxpool window offsets besides 0

assert HIDDEN % C1 == 0 and L1 % 2 == 0 and L2 % 2 == 0
assert CHA_PO_2 == (HIDDEN // C1 // 2 // 2) * C3


def _celu(x, a):
    return jnp.where(x > 0.0, x, a * (jnp.exp(jnp.minimum(x, 0.0) / a) - 1.0))


def _full_spec(shape):
    return pl.BlockSpec(shape, lambda *_: (0,) * len(shape))


# ------------------------------- fused kernel --------------------------------
def fused_cnn_kernel(x_ref, wexp_ref, bexp_ref,
                     m1_ref, b1_ref, m2_ref, b2_ref,
                     m3_ref, b3_ref, m4_ref, b4_ref,
                     mm1_ref, mp1_ref, mp2_ref,
                     wd_ref, bd_ref, o_ref):
    relu = lambda v: jnp.maximum(v, 0.0)
    dot = lambda a, b: jnp.dot(a, b, preferred_element_type=jnp.float32)

    # expand: BN0 + weight-normed Linear folded into (Wexp, bexp), then CELU.
    h = _celu(dot(x_ref[...], wexp_ref[...]) + bexp_ref[...], CELU_ALPHA)   # (B, 256)

    # conv1 block: BN1 + conv1a ('same', no bias) as one matrix; ReLU.
    a = relu(dot(h, m1_ref[...]) + b1_ref[...])                             # (B, C2*L1)
    # AdaptiveAvgPool(16->8) + BN2 + conv1b(+bias) as one matrix; ReLU.  Gate tensor.
    t = relu(dot(a, m2_ref[...]) + b2_ref[...])                             # (B, C2*L2)

    # conv2 block (two_stage): BN3+conv2a, BN4+conv2b, each one matrix; ReLU.
    z = relu(dot(t, m3_ref[...]) + b3_ref[...])                             # (B, C2*L2)
    z = relu(dot(z, m4_ref[...]) + b4_ref[...])                             # (B, C3*L2)
    g = z * t                                                               # gated, >= 0

    # MaxPool1d(kernel=4, stride=2, padding=1) within each channel's L2-lane
    # block: elementwise max over masked lane rolls.  Because g >= 0, masking
    # with 0 is equivalent to the reference's -inf padding.
    n_lanes = C3 * L2
    m = g                                                    # offset d = 0 term
    for d, mref in ((-1, mm1_ref), (1, mp1_ref), (2, mp2_ref)):
        shifted = pltpu.roll(g, shift=(-d) % n_lanes, axis=1)   # shifted[:, i] = g[:, i+d]
        m = jnp.maximum(m, shifted * mref[...])

    # BN5 + dense (weight_norm dim=0), plus the strided pool-lane selection and
    # PyTorch (C, L) flatten order, all folded into (Wd, bd).
    o_ref[...] = dot(m, wd_ref[...]) + bd_ref[...]                          # (B, 4)


# ------------------------- parameter construction ---------------------------
def init_raw_params(key):
    keys = iter(jax.random.split(key, 64))

    def nrm(shape, scale):
        return scale * jax.random.normal(next(keys), shape, jnp.float32)

    def uni(shape, lo, hi):
        return jax.random.uniform(next(keys), shape, jnp.float32, lo, hi)

    def bn(n):
        return dict(g=uni((n,), 0.8, 1.2), b=nrm((n,), 0.1),
                    rm=nrm((n,), 0.1), rv=uni((n,), 0.5, 1.5))

    raw = {}
    raw['emb'] = [nrm((n, EMB_DIM), 0.5) for n in N_CATEGORIES]
    raw['bn0'] = bn(F_TOTAL)
    raw['exp_v'] = nrm((HIDDEN, F_TOTAL), 0.1)
    raw['exp_g'] = jnp.linalg.norm(raw['exp_v']) * uni((), 0.8, 1.2)
    raw['exp_b'] = nrm((HIDDEN,), 0.1)
    raw['bn1'] = bn(C1)
    raw['c1a_v'] = nrm((C2, C1, K1), 0.1)
    raw['c1a_g'] = jnp.linalg.norm(raw['c1a_v']) * uni((), 0.8, 1.2)
    raw['bn2'] = bn(C2)
    raw['c1b_v'] = nrm((C2, C2, 3), 0.08)
    raw['c1b_g'] = jnp.linalg.norm(raw['c1b_v']) * uni((), 0.8, 1.2)
    raw['c1b_b'] = nrm((C2,), 0.1)
    raw['bn3'] = bn(C2)
    raw['c2a_v'] = nrm((C2, C2, 3), 0.08)
    raw['c2a_g'] = jnp.linalg.norm(raw['c2a_v']) * uni((), 0.8, 1.2)
    raw['c2a_b'] = nrm((C2,), 0.1)
    raw['bn4'] = bn(C2)
    raw['c2b_v'] = nrm((C3, C2, 5), 0.06)
    raw['c2b_g'] = jnp.linalg.norm(raw['c2b_v']) * uni((), 0.8, 1.2)
    raw['c2b_b'] = nrm((C3,), 0.1)
    raw['bn5'] = bn(CHA_PO_2)
    raw['d_v'] = nrm((NUM_TARGETS, CHA_PO_2), 0.1)
    raw['d_g'] = jnp.linalg.norm(raw['d_v'], axis=1, keepdims=True) * uni((NUM_TARGETS, 1), 0.8, 1.2)
    raw['d_b'] = nrm((NUM_TARGETS,), 0.1)
    return raw


def _fold_bn_vec(p):
    s = p['g'] / jnp.sqrt(p['rv'] + BN_EPS)
    return s, p['b'] - p['rm'] * s


def _wn_all(v, g):      # weight_norm(dim=None): scalar g, Frobenius norm
    return g * v / jnp.linalg.norm(v)


def _wn_dim0(v, g):     # weight_norm(dim=0) for Linear weight (out, in)
    return v * (g / jnp.linalg.norm(v, axis=1, keepdims=True))


def _conv1d_as_matrix(w, length):
    """'same' stride-1 Conv1d as a dense matrix on channel-major flat vectors.

    w: (Cout, Cin, K).  Returns M of shape (Cin*length, Cout*length) with
    M[ci*L+li, co*L+lo] = w[co, ci, li-lo+pad] when that tap index is in range
    (zero otherwise — this also encodes the zero padding)."""
    c_out, c_in, k_sz = w.shape
    pad = k_sz // 2
    li = np.arange(length)[:, None]
    lo = np.arange(length)[None, :]
    k_idx = li - lo + pad                                   # (L, L)
    valid = (k_idx >= 0) & (k_idx < k_sz)
    k_safe = np.clip(k_idx, 0, k_sz - 1)
    wk = w[:, :, k_safe] * jnp.asarray(valid, w.dtype)[None, None, :, :]  # (Cout,Cin,L,L)
    return jnp.transpose(wk, (1, 2, 0, 3)).reshape(c_in * length, c_out * length)


def _avgpool_matrix(channels, l_in, l_out):
    """AdaptiveAvgPool1d (evenly divisible, 2:1) on channel-major flat vectors."""
    m = np.zeros((channels * l_in, channels * l_out), np.float32)
    for c in range(channels):
        for p in range(l_out):
            m[c * l_in + 2 * p, c * l_out + p] = 0.5
            m[c * l_in + 2 * p + 1, c * l_out + p] = 0.5
    return jnp.asarray(m)


def derive_kernel_params(raw):
    """Fold BN / weight_norm / conv padding / pooling / flatten-order into a
    small set of dense matrices + bias rows (done once, outside the kernel)."""
    We  = _wn_all(raw['exp_v'], raw['exp_g'])            # (HIDDEN, F_TOTAL)
    W1a = _wn_all(raw['c1a_v'], raw['c1a_g'])            # (C2, C1, K1)
    W1b = _wn_all(raw['c1b_v'], raw['c1b_g'])            # (C2, C2, 3)
    W2a = _wn_all(raw['c2a_v'], raw['c2a_g'])            # (C2, C2, 3)
    W2b = _wn_all(raw['c2b_v'], raw['c2b_g'])            # (C3, C2, 5)
    Wd  = _wn_dim0(raw['d_v'], raw['d_g'])               # (NUM_TARGETS, CHA_PO_2)

    s0, h0 = _fold_bn_vec(raw['bn0'])
    s1, h1 = _fold_bn_vec(raw['bn1'])
    s2, h2 = _fold_bn_vec(raw['bn2'])
    s3, h3 = _fold_bn_vec(raw['bn3'])
    s4, h4 = _fold_bn_vec(raw['bn4'])
    s5, h5 = _fold_bn_vec(raw['bn5'])

    kp = {}
    # expand: (x*s0 + h0) @ We.T + be
    kp['Wexp'] = s0[:, None] * We.T                                      # (32, 256)
    kp['bexp'] = (h0 @ We.T + raw['exp_b'])[None, :]

    # BN1 -> conv1a (no bias)
    CM1 = _conv1d_as_matrix(W1a, L1)                                     # (256, 512)
    kp['M1'] = jnp.repeat(s1, L1)[:, None] * CM1
    kp['b1'] = (jnp.repeat(h1, L1) @ CM1)[None, :]

    # AdaptiveAvgPool(16->8) -> BN2 -> conv1b (+bias)
    P   = _avgpool_matrix(C2, L1, L2)                                    # (512, 256)
    CM2 = _conv1d_as_matrix(W1b, L2)                                     # (256, 256)
    kp['M2'] = P @ (jnp.repeat(s2, L2)[:, None] * CM2)
    kp['b2'] = (jnp.repeat(h2, L2) @ CM2 + jnp.repeat(raw['c1b_b'], L2))[None, :]

    # BN3 -> conv2a (+bias)
    CM3 = _conv1d_as_matrix(W2a, L2)
    kp['M3'] = jnp.repeat(s3, L2)[:, None] * CM3
    kp['b3'] = (jnp.repeat(h3, L2) @ CM3 + jnp.repeat(raw['c2a_b'], L2))[None, :]

    # BN4 -> conv2b (+bias)
    CM4 = _conv1d_as_matrix(W2b, L2)                                     # (256, 256)
    kp['M4'] = jnp.repeat(s4, L2)[:, None] * CM4
    kp['b4'] = (jnp.repeat(h4, L2) @ CM4 + jnp.repeat(raw['c2b_b'], L2))[None, :]

    # MaxPool lane masks (offsets -1, +1, +2; offset 0 is all ones -> implicit).
    lpos = np.arange(C3 * L2) % L2
    for name, d in zip(('mask_m1', 'mask_p1', 'mask_p2'), POOL_OFFSETS):
        kp[name] = jnp.asarray(((lpos + d >= 0) & (lpos + d < L2))
                               .astype(np.float32))[None, :]             # (1, 256)

    # Pool-lane selection (output j lives at lane c*L2 + 2j) + PyTorch (C,L3)
    # flatten order + BN5, folded into the dense weight.
    sel = np.zeros((C3 * L2, CHA_PO_2), np.float32)
    for c in range(C3):
        for j in range(L3):
            sel[c * L2 + 2 * j, c * L3 + j] = 1.0
    kp['Wd'] = jnp.asarray(sel) @ (s5[:, None] * Wd.T)                   # (256, 4)
    kp['bd'] = (h5 @ Wd.T + raw['d_b'])[None, :]
    return kp


# ------------------------------ Pallas forward -------------------------------
def cnn_forward_pallas(x_num, x_cat, emb_tables, kp):
    # Embedding lookups + concat + Dropout(identity) stay in XLA (tiny gather).
    embs = [emb_tables[i][x_cat[:, i]] for i in range(len(N_CATEGORIES))]
    x = jnp.concatenate([x_num, jnp.concatenate(embs, axis=1)], axis=1)   # (B, F_TOTAL)
    batch = x.shape[0]

    operands = (x, kp['Wexp'], kp['bexp'],
                kp['M1'], kp['b1'], kp['M2'], kp['b2'],
                kp['M3'], kp['b3'], kp['M4'], kp['b4'],
                kp['mask_m1'], kp['mask_p1'], kp['mask_p2'],
                kp['Wd'], kp['bd'])

    return pl.pallas_call(
        fused_cnn_kernel,
        out_shape=jax.ShapeDtypeStruct((batch, NUM_TARGETS), jnp.float32),
        grid=(1,),
        in_specs=[_full_spec(op.shape) for op in operands],
        out_specs=_full_spec((batch, NUM_TARGETS)),
        compiler_params=pltpu.CompilerParams(dimension_semantics=("arbitrary",)),
    )(*operands)


# ---------------------- pure-JAX reference (PyTorch NCL) ---------------------
def reference_forward(x_num, x_cat, raw):
    def bn1d(x, p):          # (B, N) feature-wise
        return (x - p['rm']) / jnp.sqrt(p['rv'] + BN_EPS) * p['g'] + p['b']

    def bn1d_c(x, p):        # (B, C, L) channel-wise
        return ((x - p['rm'][None, :, None]) / jnp.sqrt(p['rv'] + BN_EPS)[None, :, None]
                * p['g'][None, :, None] + p['b'][None, :, None])

    def conv1d(x, w, b, pad):
        y = lax.conv_general_dilated(x, w, (1,), [(pad, pad)],
                                     dimension_numbers=('NCH', 'OIH', 'NCH'))
        return y if b is None else y + b[None, :, None]

    embs = [raw['emb'][i][x_cat[:, i]] for i in range(len(N_CATEGORIES))]
    x = jnp.concatenate([x_num, jnp.concatenate(embs, axis=1)], axis=1)
    x = bn1d(x, raw['bn0'])
    x = x @ _wn_all(raw['exp_v'], raw['exp_g']).T + raw['exp_b']
    x = _celu(x, CELU_ALPHA)
    x = x.reshape(x.shape[0], C1, L1)
    x = bn1d_c(x, raw['bn1'])
    x = jax.nn.relu(conv1d(x, _wn_all(raw['c1a_v'], raw['c1a_g']), None, K1 // 2))
    x = x.reshape(x.shape[0], C2, L2, 2).mean(axis=-1)          # AdaptiveAvgPool1d(L2)
    x = bn1d_c(x, raw['bn2'])
    x = jax.nn.relu(conv1d(x, _wn_all(raw['c1b_v'], raw['c1b_g']), raw['c1b_b'], 1))
    y = x
    x = bn1d_c(x, raw['bn3'])
    x = jax.nn.relu(conv1d(x, _wn_all(raw['c2a_v'], raw['c2a_g']), raw['c2a_b'], 1))
    x = bn1d_c(x, raw['bn4'])
    x = jax.nn.relu(conv1d(x, _wn_all(raw['c2b_v'], raw['c2b_g']), raw['c2b_b'], 2))
    x = x * y
    xp = jnp.pad(x, ((0, 0), (0, 0), (1, 1)), constant_values=-jnp.inf)
    x = jnp.stack([xp[:, :, 2 * i:2 * i + 4].max(axis=-1) for i in range(L3)], axis=-1)
    x = x.reshape(x.shape[0], -1)
    x = bn1d(x, raw['bn5'])
    x = x @ _wn_dim0(raw['d_v'], raw['d_g']).T + raw['d_b']
    return x


# ---------------------------------- main -------------------------------------
if __name__ == "__main__":
    key = jax.random.PRNGKey(0)
    kp_key, kx_key, kc_key = jax.random.split(key, 3)
    raw = init_raw_params(kp_key)
    kp = derive_kernel_params(raw)          # one-time parameter folding

    x_num = jax.random.normal(kx_key, (B, NUM_FEATURES), jnp.float32)
    cat_keys = jax.random.split(kc_key, len(N_CATEGORIES))
    x_cat = jnp.stack(
        [jax.random.randint(cat_keys[i], (B,), 0, n, jnp.int32)
         for i, n in enumerate(N_CATEGORIES)], axis=1)                 # (B, 3)

    fwd = jax.jit(cnn_forward_pallas)
    out = jax.block_until_ready(fwd(x_num, x_cat, raw['emb'], kp))
    assert out.shape == (B, NUM_TARGETS)

    ref = jax.block_until_ready(reference_forward(x_num, x_cat, raw))
    np.testing.assert_allclose(np.asarray(out), np.asarray(ref), rtol=2e-3, atol=2e-3)
    print("KERNEL_OK")
</pallas_src>

<mosaic_0001>
module attributes {stable_mosaic.version = 11 : i64} {
  func.func @fused_cnn_kernel(%arg0: i32, %arg1: memref<8x32xf32, #tpu.memory_space<vmem>>, %arg2: memref<32x256xf32, #tpu.memory_space<vmem>>, %arg3: memref<1x256xf32, #tpu.memory_space<vmem>>, %arg4: memref<256x512xf32, #tpu.memory_space<vmem>>, %arg5: memref<1x512xf32, #tpu.memory_space<vmem>>, %arg6: memref<512x256xf32, #tpu.memory_space<vmem>>, %arg7: memref<1x256xf32, #tpu.memory_space<vmem>>, %arg8: memref<256x256xf32, #tpu.memory_space<vmem>>, %arg9: memref<1x256xf32, #tpu.memory_space<vmem>>, %arg10: memref<256x256xf32, #tpu.memory_space<vmem>>, %arg11: memref<1x256xf32, #tpu.memory_space<vmem>>, %arg12: memref<1x256xf32, #tpu.memory_space<vmem>>, %arg13: memref<1x256xf32, #tpu.memory_space<vmem>>, %arg14: memref<1x256xf32, #tpu.memory_space<vmem>>, %arg15: memref<256x4xf32, #tpu.memory_space<vmem>>, %arg16: memref<1x4xf32, #tpu.memory_space<vmem>>, %arg17: memref<8x4xf32, #tpu.memory_space<vmem>>) attributes {dimension_semantics = [#tpu.dimension_semantics<arbitrary>], iteration_bounds = array<i64: 1>, scalar_prefetch = 0 : i64, scratch_operands = 0 : i64, tpu.core_type = #tpu.core_type<tc>, window_params = [{pipeline_mode = #tpu.pipeline_mode<synchronous>, transform_indices = @transform_0, window_bounds = array<i64: 8, 32>}, {pipeline_mode = #tpu.pipeline_mode<synchronous>, transform_indices = @transform_1, window_bounds = array<i64: 32, 256>}, {pipeline_mode = #tpu.pipeline_mode<synchronous>, transform_indices = @transform_2, window_bounds = array<i64: 1, 256>}, {pipeline_mode = #tpu.pipeline_mode<synchronous>, transform_indices = @transform_3, window_bounds = array<i64: 256, 512>}, {pipeline_mode = #tpu.pipeline_mode<synchronous>, transform_indices = @transform_4, window_bounds = array<i64: 1, 512>}, {pipeline_mode = #tpu.pipeline_mode<synchronous>, transform_indices = @transform_5, window_bounds = array<i64: 512, 256>}, {pipeline_mode = #tpu.pipeline_mode<synchronous>, transform_indices = @transform_6, window_bounds = array<i64: 1, 256>}, {pipeline_mode = #tpu.pipeline_mode<synchronous>, transform_indices = @transform_7, window_bounds = array<i64: 256, 256>}, {pipeline_mode = #tpu.pipeline_mode<synchronous>, transform_indices = @transform_8, window_bounds = array<i64: 1, 256>}, {pipeline_mode = #tpu.pipeline_mode<synchronous>, transform_indices = @transform_9, window_bounds = array<i64: 256, 256>}, {pipeline_mode = #tpu.pipeline_mode<synchronous>, transform_indices = @transform_10, window_bounds = array<i64: 1, 256>}, {pipeline_mode = #tpu.pipeline_mode<synchronous>, transform_indices = @transform_11, window_bounds = array<i64: 1, 256>}, {pipeline_mode = #tpu.pipeline_mode<synchronous>, transform_indices = @transform_12, window_bounds = array<i64: 1, 256>}, {pipeline_mode = #tpu.pipeline_mode<synchronous>, transform_indices = @transform_13, window_bounds = array<i64: 1, 256>}, {pipeline_mode = #tpu.pipeline_mode<synchronous>, transform_indices = @transform_14, window_bounds = array<i64: 256, 4>}, {pipeline_mode = #tpu.pipeline_mode<synchronous>, transform_indices = @transform_15, window_bounds = array<i64: 1, 4>}, {pipeline_mode = #tpu.pipeline_mode<synchronous>, transform_indices = @transform_16, window_bounds = array<i64: 8, 4>}]} {
    %c0 = arith.constant 0 : index
    %c0_0 = arith.constant 0 : index
    %0 = vector.load %arg1[%c0, %c0_0] : memref<8x32xf32, #tpu.memory_space<vmem>>, vector<8x32xf32>
    %c0_1 = arith.constant 0 : index
    %c0_2 = arith.constant 0 : index
    %1 = vector.load %arg2[%c0_1, %c0_2] : memref<32x256xf32, #tpu.memory_space<vmem>>, vector<32x256xf32>
    %cst = arith.constant dense<0.000000e+00> : vector<8x256xf32>
    %2 = tpu.matmul %0, %1, %cst {dimension_numbers = #tpu.dot_dimension_numbers<[1], [0], [0], [1], [0, 0, 1, 1], [], []>} : vector<8x32xf32>, vector<32x256xf32>, vector<8x256xf32> -> vector<8x256xf32>
    %c0_3 = arith.constant 0 : index
    %c0_4 = arith.constant 0 : index
    %3 = vector.load %arg3[%c0_3, %c0_4] : memref<1x256xf32, #tpu.memory_space<vmem>>, vector<1x256xf32>
    %4 = vector.broadcast %3 : vector<1x256xf32> to vector<8x256xf32>
    %5 = arith.addf %2, %4 : vector<8x256xf32>
    %cst_5 = arith.constant 0.000000e+00 : f32
    %6 = vector.broadcast %cst_5 : f32 to vector<8x256xf32>
    %7 = arith.cmpf ogt, %5, %6 : vector<8x256xf32>
    %cst_6 = arith.constant 0.000000e+00 : f32
    %8 = vector.broadcast %cst_6 : f32 to vector<8x256xf32>
    %9 = arith.minimumf %5, %8 : vector<8x256xf32>
    %cst_7 = arith.constant 6.000000e-02 : f32
    %10 = vector.broadcast %cst_7 : f32 to vector<8x256xf32>
    %11 = arith.divf %9, %10 : vector<8x256xf32>
    %12 = math.exp %11 : vector<8x256xf32>
    %cst_8 = arith.constant 1.000000e+00 : f32
    %13 = vector.broadcast %cst_8 : f32 to vector<8x256xf32>
    %14 = arith.subf %12, %13 : vector<8x256xf32>
    %cst_9 = arith.constant 6.000000e-02 : f32
    %15 = vector.broadcast %cst_9 : f32 to vector<8x256xf32>
    %16 = arith.mulf %15, %14 : vector<8x256xf32>
    %17 = arith.select %7, %5, %16 : vector<8x256xi1>, vector<8x256xf32>
    %c0_10 = arith.constant 0 : index
    %c0_11 = arith.constant 0 : index
    %18 = vector.load %arg4[%c0_10, %c0_11] : memref<256x512xf32, #tpu.memory_space<vmem>>, vector<256x512xf32>
    %cst_12 = arith.constant dense<0.000000e+00> : vector<8x512xf32>
    %19 = tpu.matmul %17, %18, %cst_12 {dimension_numbers = #tpu.dot_dimension_numbers<[1], [0], [0], [1], [0, 0, 1, 1], [], []>} : vector<8x256xf32>, vector<256x512xf32>, vector<8x512xf32> -> vector<8x512xf32>
    %c0_13 = arith.constant 0 : index
    %c0_14 = arith.constant 0 : index
    %20 = vector.load %arg5[%c0_13, %c0_14] : memref<1x512xf32, #tpu.memory_space<vmem>>, vector<1x512xf32>
    %21 = vector.broadcast %20 : vector<1x512xf32> to vector<8x512xf32>
    %22 = arith.addf %19, %21 : vector<8x512xf32>
    %cst_15 = arith.constant 0.000000e+00 : f32
    %23 = vector.broadcast %cst_15 : f32 to vector<8x512xf32>
    %24 = arith.maximumf %22, %23 : vector<8x512xf32>
    %c0_16 = arith.constant 0 : index
    %c0_17 = arith.constant 0 : index
    %25 = vector.load %arg6[%c0_16, %c0_17] : memref<512x256xf32, #tpu.memory_space<vmem>>, vector<512x256xf32>
    %cst_18 = arith.constant dense<0.000000e+00> : vector<8x256xf32>
    %26 = tpu.matmul %24, %25, %cst_18 {dimension_numbers = #tpu.dot_dimension_numbers<[1], [0], [0], [1], [0, 0, 1, 1], [], []>} : vector<8x512xf32>, vector<512x256xf32>, vector<8x256xf32> -> vector<8x256xf32>
    %c0_19 = arith.constant 0 : index
    %c0_20 = arith.constant 0 : index
    %27 = vector.load %arg7[%c0_19, %c0_20] : memref<1x256xf32, #tpu.memory_space<vmem>>, vector<1x256xf32>
    %28 = vector.broadcast %27 : vector<1x256xf32> to vector<8x256xf32>
    %29 = arith.addf %26, %28 : vector<8x256xf32>
    %cst_21 = arith.constant 0.000000e+00 : f32
    %30 = vector.broadcast %cst_21 : f32 to vector<8x256xf32>
    %31 = arith.maximumf %29, %30 : vector<8x256xf32>
    %c0_22 = arith.constant 0 : index
    %c0_23 = arith.constant 0 : index
    %32 = vector.load %arg8[%c0_22, %c0_23] : memref<256x256xf32, #tpu.memory_space<vmem>>, vector<256x256xf32>
    %cst_24 = arith.constant dense<0.000000e+00> : vector<8x256xf32>
    %33 = tpu.matmul %31, %32, %cst_24 {dimension_numbers = #tpu.dot_dimension_numbers<[1], [0], [0], [1], [0, 0, 1, 1], [], []>} : vector<8x256xf32>, vector<256x256xf32>, vector<8x256xf32> -> vector<8x256xf32>
    %c0_25 = arith.constant 0 : index
    %c0_26 = arith.constant 0 : index
    %34 = vector.load %arg9[%c0_25, %c0_26] : memref<1x256xf32, #tpu.memory_space<vmem>>, vector<1x256xf32>
    %35 = vector.broadcast %34 : vector<1x256xf32> to vector<8x256xf32>
    %36 = arith.addf %33, %35 : vector<8x256xf32>
    %cst_27 = arith.constant 0.000000e+00 : f32
    %37 = vector.broadcast %cst_27 : f32 to vector<8x256xf32>
    %38 = arith.maximumf %36, %37 : vector<8x256xf32>
    %c0_28 = arith.constant 0 : index
    %c0_29 = arith.constant 0 : index
    %39 = vector.load %arg10[%c0_28, %c0_29] : memref<256x256xf32, #tpu.memory_space<vmem>>, vector<256x256xf32>
    %cst_30 = arith.constant dense<0.000000e+00> : vector<8x256xf32>
    %40 = tpu.matmul %38, %39, %cst_30 {dimension_numbers = #tpu.dot_dimension_numbers<[1], [0], [0], [1], [0, 0, 1, 1], [], []>} : vector<8x256xf32>, vector<256x256xf32>, vector<8x256xf32> -> vector<8x256xf32>
    %c0_31 = arith.constant 0 : index
    %c0_32 = arith.constant 0 : index
    %41 = vector.load %arg11[%c0_31, %c0_32] : memref<1x256xf32, #tpu.memory_space<vmem>>, vector<1x256xf32>
    %42 = vector.broadcast %41 : vector<1x256xf32> to vector<8x256xf32>
    %43 = arith.addf %40, %42 : vector<8x256xf32>
    %cst_33 = arith.constant 0.000000e+00 : f32
    %44 = vector.broadcast %cst_33 : f32 to vector<8x256xf32>
    %45 = arith.maximumf %43, %44 : vector<8x256xf32>
    %46 = arith.mulf %45, %31 : vector<8x256xf32>
    %c1_i32 = arith.constant 1 : i32
    %47 = tpu.dynamic_rotate %46 by %c1_i32 dim 1 : vector<8x256xf32>, i32 -> vector<8x256xf32>
    %c0_34 = arith.constant 0 : index
    %c0_35 = arith.constant 0 : index
    %48 = vector.load %arg12[%c0_34, %c0_35] : memref<1x256xf32, #tpu.memory_space<vmem>>, vector<1x256xf32>
    %49 = vector.broadcast %48 : vector<1x256xf32> to vector<8x256xf32>
    %50 = arith.mulf %47, %49 : vector<8x256xf32>
    %51 = arith.maximumf %46, %50 : vector<8x256xf32>
    %c255_i32 = arith.constant 255 : i32
    %52 = tpu.dynamic_rotate %46 by %c255_i32 dim 1 : vector<8x256xf32>, i32 -> vector<8x256xf32>
    %c0_36 = arith.constant 0 : index
    %c0_37 = arith.constant 0 : index
    %53 = vector.load %arg13[%c0_36, %c0_37] : memref<1x256xf32, #tpu.memory_space<vmem>>, vector<1x256xf32>
    %54 = vector.broadcast %53 : vector<1x256xf32> to vector<8x256xf32>
    %55 = arith.mulf %52, %54 : vector<8x256xf32>
    %56 = arith.maximumf %51, %55 : vector<8x256xf32>
    %c254_i32 = arith.constant 254 : i32
    %57 = tpu.dynamic_rotate %46 by %c254_i32 dim 1 : vector<8x256xf32>, i32 -> vector<8x256xf32>
    %c0_38 = arith.constant 0 : index
    %c0_39 = arith.constant 0 : index
    %58 = vector.load %arg14[%c0_38, %c0_39] : memref<1x256xf32, #tpu.memory_space<vmem>>, vector<1x256xf32>
    %59 = vector.broadcast %58 : vector<1x256xf32> to vector<8x256xf32>
    %60 = arith.mulf %57, %59 : vector<8x256xf32>
    %61 = arith.maximumf %56, %60 : vector<8x256xf32>
    %c0_40 = arith.constant 0 : index
    %c0_41 = arith.constant 0 : index
    %62 = vector.load %arg15[%c0_40, %c0_41] : memref<256x4xf32, #tpu.memory_space<vmem>>, vector<256x4xf32>
    %cst_42 = arith.constant dense<0.000000e+00> : vector<8x4xf32>
    %63 = tpu.matmul %61, %62, %cst_42 {dimension_numbers = #tpu.dot_dimension_numbers<[1], [0], [0], [1], [0, 0, 1, 1], [], []>} : vector<8x256xf32>, vector<256x4xf32>, vector<8x4xf32> -> vector<8x4xf32>
    %c0_43 = arith.constant 0 : index
    %c0_44 = arith.constant 0 : index
    %64 = vector.load %arg16[%c0_43, %c0_44] : memref<1x4xf32, #tpu.memory_space<vmem>>, vector<1x4xf32>
    %65 = vector.broadcast %64 : vector<1x4xf32> to vector<8x4xf32>
    %66 = arith.addf %63, %65 : vector<8x4xf32>
    %c0_45 = arith.constant 0 : index
    %c0_46 = arith.constant 0 : index
    %67 = vector.load %arg17[%c0_45, %c0_46] : memref<8x4xf32, #tpu.memory_space<vmem>>, vector<8x4xf32>
    tpu.vector_store %arg17[%c0_45, %c0_46], %66 {strides = array<i32>} : memref<8x4xf32, #tpu.memory_space<vmem>>, vector<8x4xf32>,
    return
  }
  func.func @transform_0(%arg0: i32) -> (i32, i32) {
    %c0_i32 = arith.constant 0 : i32
    %c0_i32_0 = arith.constant 0 : i32
    %c0_i32_1 = arith.constant 0 : i32
    return %c0_i32, %c0_i32_0 : i32, i32
  }
  func.func @transform_1(%arg0: i32) -> (i32, i32) {
    %c0_i32 = arith.constant 0 : i32
    %c0_i32_0 = arith.constant 0 : i32
    %c0_i32_1 = arith.constant 0 : i32
    return %c0_i32, %c0_i32_0 : i32, i32
  }
  func.func @transform_2(%arg0: i32) -> (i32, i32) {
    %c0_i32 = arith.constant 0 : i32
    %c0_i32_0 = arith.constant 0 : i32
    %c0_i32_1 = arith.constant 0 : i32
    return %c0_i32, %c0_i32_0 : i32, i32
  }
  func.func @transform_3(%arg0: i32) -> (i32, i32) {
    %c0_i32 = arith.constant 0 : i32
    %c0_i32_0 = arith.constant 0 : i32
    %c0_i32_1 = arith.constant 0 : i32
    return %c0_i32, %c0_i32_0 : i32, i32
  }
  func.func @transform_4(%arg0: i32) -> (i32, i32) {
    %c0_i32 = arith.constant 0 : i32
    %c0_i32_0 = arith.constant 0 : i32
    %c0_i32_1 = arith.constant 0 : i32
    return %c0_i32, %c0_i32_0 : i32, i32
  }
  func.func @transform_5(%arg0: i32) -> (i32, i32) {
    %c0_i32 = arith.constant 0 : i32
    %c0_i32_0 = arith.constant 0 : i32
    %c0_i32_1 = arith.constant 0 : i32
    return %c0_i32, %c0_i32_0 : i32, i32
  }
  func.func @transform_6(%arg0: i32) -> (i32, i32) {
    %c0_i32 = arith.constant 0 : i32
    %c0_i32_0 = arith.constant 0 : i32
    %c0_i32_1 = arith.constant 0 : i32
    return %c0_i32, %c0_i32_0 : i32, i32
  }
  func.func @transform_7(%arg0: i32) -> (i32, i32) {
    %c0_i32 = arith.constant 0 : i32
    %c0_i32_0 = arith.constant 0 : i32
    %c0_i32_1 = arith.constant 0 : i32
    return %c0_i32, %c0_i32_0 : i32, i32
  }
  func.func @transform_8(%arg0: i32) -> (i32, i32) {
    %c0_i32 = arith.constant 0 : i32
    %c0_i32_0 = arith.constant 0 : i32
    %c0_i32_1 = arith.constant 0 : i32
    return %c0_i32, %c0_i32_0 : i32, i32
  }
  func.func @transform_9(%arg0: i32) -> (i32, i32) {
    %c0_i32 = arith.constant 0 : i32
    %c0_i32_0 = arith.constant 0 : i32
    %c0_i32_1 = arith.constant 0 : i32
    return %c0_i32, %c0_i32_0 : i32, i32
  }
  func.func @transform_10(%arg0: i32) -> (i32, i32) {
    %c0_i32 = arith.constant 0 : i32
    %c0_i32_0 = arith.constant 0 : i32
    %c0_i32_1 = arith.constant 0 : i32
    return %c0_i32, %c0_i32_0 : i32, i32
  }
  func.func @transform_11(%arg0: i32) -> (i32, i32) {
    %c0_i32 = arith.constant 0 : i32
    %c0_i32_0 = arith.constant 0 : i32
    %c0_i32_1 = arith.constant 0 : i32
    return %c0_i32, %c0_i32_0 : i32, i32
  }
  func.func @transform_12(%arg0: i32) -> (i32, i32) {
    %c0_i32 = arith.constant 0 : i32
    %c0_i32_0 = arith.constant 0 : i32
    %c0_i32_1 = arith.constant 0 : i32
    return %c0_i32, %c0_i32_0 : i32, i32
  }
  func.func @transform_13(%arg0: i32) -> (i32, i32) {
    %c0_i32 = arith.constant 0 : i32
    %c0_i32_0 = arith.constant 0 : i32
    %c0_i32_1 = arith.constant 0 : i32
    return %c0_i32, %c0_i32_0 : i32, i32
  }
  func.func @transform_14(%arg0: i32) -> (i32, i32) {
    %c0_i32 = arith.constant 0 : i32
    %c0_i32_0 = arith.constant 0 : i32
    %c0_i32_1 = arith.constant 0 : i32
    return %c0_i32, %c0_i32_0 : i32, i32
  }
  func.func @transform_15(%arg0: i32) -> (i32, i32) {
    %c0_i32 = arith.constant 0 : i32
    %c0_i32_0 = arith.constant 0 : i32
    %c0_i32_1 = arith.constant 0 : i32
    return %c0_i32, %c0_i32_0 : i32, i32
  }
  func.func @transform_16(%arg0: i32) -> (i32, i32) {
    %c0_i32 = arith.constant 0 : i32
    %c0_i32_0 = arith.constant 0 : i32
    %c0_i32_1 = arith.constant 0 : i32
    return %c0_i32, %c0_i32_0 : i32, i32
  }
}

</mosaic_0001>

<llo_original>
// kernel: cnn_forward_pallas.1
$region0: #{cnn_forward_pallas.1}
  #allocation0 [shape = 'u32[]', space=smem, size = 0x4, offset = 0x4, fixed_abs, tag = 'smem constant byte address 0x4 - core index']
  #allocation1 [shape = 'u32[144,128]{1,0:T(1,128)}', space=vmem, size = 0x12000, scoped, tag = 'internal scratch']
  %s0 = inlined_call_operand.vmem [shape: f32[8,32], index: 0, kind: input, shape index: {}]
  %s1 = inlined_call_operand.vmem [shape: f32[32,256], index: 1, kind: input, shape index: {}]
  %s2 = inlined_call_operand.vmem [shape: f32[1,256], index: 2, kind: input, shape index: {}]
  %s3 = inlined_call_operand.hbm [shape: f32[256,512], index: 3, kind: input, shape index: {}]
  %s4 = inlined_call_operand.vmem [shape: f32[1,512], index: 4, kind: input, shape index: {}]
  %s5 = inlined_call_operand.hbm [shape: f32[512,256], index: 5, kind: input, shape index: {}]
  %s6 = inlined_call_operand.vmem [shape: f32[1,256], index: 6, kind: input, shape index: {}]
  %s7 = inlined_call_operand.vmem [shape: f32[256,256], index: 7, kind: input, shape index: {}]
  %s8 = inlined_call_operand.vmem [shape: f32[1,256], index: 8, kind: input, shape index: {}]
  %s9 = inlined_call_operand.hbm [shape: f32[256,256], index: 9, kind: input, shape index: {}]
  %s10 = inlined_call_operand.vmem [shape: f32[1,256], index: 10, kind: input, shape index: {}]
  %s11 = inlined_call_operand.vmem [shape: f32[1,256], index: 11, kind: input, shape index: {}]
  %s12 = inlined_call_operand.vmem [shape: f32[1,256], index: 12, kind: input, shape index: {}]
  %s13 = inlined_call_operand.vmem [shape: f32[1,256], index: 13, kind: input, shape index: {}]
  %s14 = inlined_call_operand.vmem [shape: f32[256,4], index: 14, kind: input, shape index: {}]
  %s15 = inlined_call_operand.vmem [shape: f32[1,4], index: 15, kind: input, shape index: {}]
  %s16 = inlined_call_operand.vmem [shape: f32[8,4], index: 16, kind: output, shape index: {}]
  %s17 = sld [smem:[#allocation0]]
  $region86: #{cnn_forward_pallas.1} parent=0
    _
  %s19 = ssub.s32 1, %s17
  %s20 = scalar_select 0, %s19, %s17
  $region1: #{cnn_forward_pallas.1} parent=0
    #allocation2 [shape = 'u8[524288]{0}', space=vmem, size = 0x80000, scoped, tag = 'input window, operand 3, single buffered']
    #allocation3 [shape = 's32[1]{0}', space=sflag, size = 0x4, scoped, tag = 'scoped memory for cnn_forward_pallas.1']
    #allocation4 [shape = 'u8[524288]{0}', space=vmem, size = 0x80000, scoped, tag = 'input window, operand 5, single buffered']
    #allocation5 [shape = 's32[1]{0}', space=sflag, size = 0x4, scoped, tag = 'scoped memory for cnn_forward_pallas.1']
    #allocation6 [shape = 'u8[262144]{0}', space=vmem, size = 0x40000, scoped, tag = 'input window, operand 9, single buffered']
    %21 = vsyncpa [#allocation3], 0
    %22 = vsyncpa [#allocation5], 0
    // Predicated region
    $region2: #{cnn_forward_pallas.1} parent=1 // pred_check
      _
    $region3: #{cnn_forward_pallas.1} parent=1 // pred_check_branch
      %24 = sbr.rel (0) target = $region5
    $region4: #{cnn_forward_pallas.1} parent=1 // pred_region
      _
    $region5: #{cnn_forward_pallas.1} parent=1 // pred_fallthru
      _
    // Predicated region
    $region6: #{cnn_forward_pallas.1} parent=1 // pred_check
      _
    $region7: #{cnn_forward_pallas.1} parent=1 // pred_check_branch
      %26 = sbr.rel (0) target = $region9
    $region8: #{cnn_forward_pallas.1} parent=1 // pred_region
      _
    $region9: #{cnn_forward_pallas.1} parent=1 // pred_fallthru
      _
    // Predicated region
    $region10: #{cnn_forward_pallas.1} parent=1 // pred_check
      _
    $region11: #{cnn_forward_pallas.1} parent=1 // pred_check_branch
      %28 = sbr.rel (0) target = $region13
    $region12: #{cnn_forward_pallas.1} parent=1 // pred_region
      _
    $region13: #{cnn_forward_pallas.1} parent=1 // pred_fallthru
      _
    // Predicated region
    $region14: #{cnn_forward_pallas.1} parent=1 // pred_check
      _
    $region15: #{cnn_forward_pallas.1} parent=1 // pred_check_branch
      %30 = sbr.rel (0) target = $region17
    $region16: #{cnn_forward_pallas.1} parent=1 // pred_region
      %s32 = ssub.s32 16384, 16384
      %33 = vsyncadd [#allocation3], %s32
      %s34 = sshll.u32 [#allocation2], 4
      %s35 = int_to_ptr.vmem [resolvable:$true] %s34
      %40 = dma.hbm_to_vmem [thread:$0]  %s3, 16384, %s35, [#allocation3], 512, 512, 32
    $region17: #{cnn_forward_pallas.1} parent=1 // pred_fallthru
      _
    // Predicated region
    $region18: #{cnn_forward_pallas.1} parent=1 // pred_check
      _
    $region19: #{cnn_forward_pallas.1} parent=1 // pred_check_branch
      %42 = sbr.rel (0) target = $region21
    $region20: #{cnn_forward_pallas.1} parent=1 // pred_region
      _
    $region21: #{cnn_forward_pallas.1} parent=1 // pred_fallthru
      _
    // Predicated region
    $region22: #{cnn_forward_pallas.1} parent=1 // pred_check
      _
    $region23: #{cnn_forward_pallas.1} parent=1 // pred_check_branch
      %44 = sbr.rel (0) target = $region25
    $region24: #{cnn_forward_pallas.1} parent=1 // pred_region
      %s46 = ssub.s32 16384, 16384
      %47 = vsyncadd [#allocation5], %s46
      %s48 = sshll.u32 [#allocation4], 4
      %s49 = int_to_ptr.vmem [resolvable:$true] %s48
      %54 = dma.hbm_to_vmem [thread:$0]  %s5, 16384, %s49, [#allocation5], 256, 256, 16
    $region25: #{cnn_forward_pallas.1} parent=1 // pred_fallthru
      _
    // Predicated region
    $region26: #{cnn_forward_pallas.1} parent=1 // pred_check
      _
    $region27: #{cnn_forward_pallas.1} parent=1 // pred_check_branch
      %56 = sbr.rel (0) target = $region29
    $region28: #{cnn_forward_pallas.1} parent=1 // pred_region
      _
    $region29: #{cnn_forward_pallas.1} parent=1 // pred_fallthru
      _
    // Predicated region
    $region30: #{cnn_forward_pallas.1} parent=1 // pred_check
      _
    $region31: #{cnn_forward_pallas.1} parent=1 // pred_check_branch
      %58 = sbr.rel (0) target = $region33
    $region32: #{cnn_forward_pallas.1} parent=1 // pred_region
      _
    $region33: #{cnn_forward_pallas.1} parent=1 // pred_fallthru
      _
    // Predicated region
    $region34: #{cnn_forward_pallas.1} parent=1 // pred_check
      _
    $region35: #{cnn_forward_pallas.1} parent=1 // pred_check_branch
      %60 = sbr.rel (0) target = $region37
    $region36: #{cnn_forward_pallas.1} parent=1 // pred_region
      _
    $region37: #{cnn_forward_pallas.1} parent=1 // pred_fallthru
      _
    // Predicated region
    $region38: #{cnn_forward_pallas.1} parent=1 // pred_check
      _
    $region39: #{cnn_forward_pallas.1} parent=1 // pred_check_branch
      %62 = sbr.rel (0) target = $region41
    $region40: #{cnn_forward_pallas.1} parent=1 // pred_region
      %s64 = ssub.s32 8192, 8192
      %65 = vsyncadd [#allocation5], %s64
      %s66 = sshll.u32 [#allocation6], 4
      %s67 = int_to_ptr.vmem [resolvable:$true] %s66
      %72 = dma.hbm_to_vmem [thread:$0]  %s9, 8192, %s67, [#allocation5], 256, 256, 16
    $region41: #{cnn_forward_pallas.1} parent=1 // pred_fallthru
      _
    // Predicated region
    $region42: #{cnn_forward_pallas.1} parent=1 // pred_check
      _
    $region43: #{cnn_forward_pallas.1} parent=1 // pred_check_branch
      %74 = sbr.rel (0) target = $region45
    $region44: #{cnn_forward_pallas.1} parent=1 // pred_region
      _
    $region45: #{cnn_forward_pallas.1} parent=1 // pred_fallthru
      _
    // Predicated region
    $region46: #{cnn_forward_pallas.1} parent=1 // pred_check
      _
    $region47: #{cnn_forward_pallas.1} parent=1 // pred_check_branch
      %76 = sbr.rel (0) target = $region49
    $region48: #{cnn_forward_pallas.1} parent=1 // pred_region
      _
    $region49: #{cnn_forward_pallas.1} parent=1 // pred_fallthru
      _
    // Predicated region
    $region50: #{cnn_forward_pallas.1} parent=1 // pred_check
      _
    $region51: #{cnn_forward_pallas.1} parent=1 // pred_check_branch
      %78 = sbr.rel (0) target = $region53
    $region52: #{cnn_forward_pallas.1} parent=1 // pred_region
      _
    $region53: #{cnn_forward_pallas.1} parent=1 // pred_fallthru
      _
    // Predicated region
    $region54: #{cnn_forward_pallas.1} parent=1 // pred_check
      _
    $region55: #{cnn_forward_pallas.1} parent=1 // pred_check_branch
      %80 = sbr.rel (0) target = $region57
    $region56: #{cnn_forward_pallas.1} parent=1 // pred_region
      _
    $region57: #{cnn_forward_pallas.1} parent=1 // pred_fallthru
      _
    // Predicated region
    $region58: #{cnn_forward_pallas.1} parent=1 // pred_check
      _
    $region59: #{cnn_forward_pallas.1} parent=1 // pred_check_branch
      %82 = sbr.rel (0) target = $region61
    $region60: #{cnn_forward_pallas.1} parent=1 // pred_region
      _
    $region61: #{cnn_forward_pallas.1} parent=1 // pred_fallthru
      _
    // Predicated region
    $region62: #{cnn_forward_pallas.1} parent=1 // pred_check
      _
    $region63: #{cnn_forward_pallas.1} parent=1 // pred_check_branch
      %84 = sbr.rel (0) target = $region65
    $region64: #{cnn_forward_pallas.1} parent=1 // pred_region
      _
    $region65: #{cnn_forward_pallas.1} parent=1 // pred_fallthru
      _
    // Predicated region
    $region66: #{cnn_forward_pallas.1} parent=1 // pred_check
      _
    $region67: #{cnn_forward_pallas.1} parent=1 // pred_check_branch
      %86 = sbr.rel (0) target = $region69
    $region68: #{cnn_forward_pallas.1} parent=1 // pred_region
      %87 = dma.done [#allocation3], 16384
    $region69: #{cnn_forward_pallas.1} parent=1 // pred_fallthru
      _
    // Predicated region
    $region70: #{cnn_forward_pallas.1} parent=1 // pred_check
      _
    $region71: #{cnn_forward_pallas.1} parent=1 // pred_check_branch
      %89 = sbr.rel (0) target = $region73
    $region72: #{cnn_forward_pallas.1} parent=1 // pred_region
      %90 = dma.done [#allocation5], 16384
    $region73: #{cnn_forward_pallas.1} parent=1 // pred_fallthru
      _
    // Predicated region
    $region74: #{cnn_forward_pallas.1} parent=1 // pred_check
      _
    $region75: #{cnn_forward_pallas.1} parent=1 // pred_check_branch
      %92 = sbr.rel (0) target = $region77
    $region76: #{cnn_forward_pallas.1} parent=1 // pred_region
      %93 = dma.done [#allocation5], 8192
    $region77: #{cnn_forward_pallas.1} parent=1 // pred_fallthru
      _
    %v94 = vld [vmem:[%s0] sm:$0xff]
    %v95 = vld [vmem:[%s1] sm:$0xff]
    %v96 = vld [vmem:[%s1 + $0x8] sm:$0xff]
    %v97 = vld [vmem:[%s1 + $0x10] sm:$0xff]
    %v98 = vld [vmem:[%s1 + $0x18] sm:$0xff]
    %v99 = vld [vmem:[%s1 + $0x20] sm:$0xff]
    %v100 = vld [vmem:[%s1 + $0x28] sm:$0xff]
    %v101 = vld [vmem:[%s1 + $0x30] sm:$0xff]
    %v102 = vld [vmem:[%s1 + $0x38] sm:$0xff]
    %v103 = vld [vmem:[%s2] sm:$0x3]
    %v105 = vlaneseq
    %v106 = vshrl.u32 %v105, 7
    %v107 = vsub.s32 0, %v106
    %v108 = vrot.slane %v103, %v107
    %v109 = vlaneseq
    %v110 = vshrl.u32 %v109, 7
    %v111 = vsub.s32 1, %v110
    %v112 = vrot.slane %v103, %v111
    %vm115 = vcmask 261120
    %v117 = vsel %vm115, %v94, 0
    %119 = vmatprep.subr.mxu0 %v96
    %120 = vmatpush1.msra.mxu0 %v95
    %121 = vmatprep.subr.mxu0 %v98
    %122 = vmatpush1.msra.mxu0 %v97
    %123 = vmatprep.subr.mxu0 %v100
    %124 = vmatpush1.msra.mxu0 %v99
    %125 = vmatprep.subr.mxu0 %v102
    %126 = vmatpush1.msra.mxu0 %v101
    %127 = vmatprep.subr.mxu0 0.0
    %128 = vmatpush1.msra.mxu0 0.0
    %129 = vmatprep.subr.mxu0 0.0
    %130 = vmatpush1.msra.mxu0 0.0
    %131 = vmatprep.subr.mxu0 0.0
    %132 = vmatpush1.msra.mxu0 0.0
    %133 = vmatprep.subr.mxu0 0.0
    %134 = vmatpush1.msra.mxu0 0.0
    %135 = vmatprep.subr.mxu0 0.0
    %136 = vmatpush1.msra.mxu0 0.0
    %137 = vmatprep.subr.mxu0 0.0
    %138 = vmatpush1.msra.mxu0 0.0
    %139 = vmatprep.subr.mxu0 0.0
    %140 = vmatpush1.msra.mxu0 0.0
    %141 = vmatprep.subr.mxu0 0.0
    %142 = vmatpush1.msra.mxu0 0.0
    %143 = vmatprep.subr.mxu0 0.0
    %144 = vmatpush1.msra.mxu0 0.0
    %145 = vmatprep.subr.mxu0 0.0
    %146 = vmatpush1.msra.mxu0 0.0
    %147 = vmatprep.subr.mxu0 0.0
    %148 = vmatpush1.msra.mxu0 0.0
    %149 = vmatprep.subr.mxu0 0.0
    %150 = vmatpush1.msra.mxu0 0.0
    %151 = vmatprep.subr.mxu0 0.0
    %152 = vmatpush1.msra.mxu0 0.0
    %153 = vmatprep.subr.mxu0 0.0
    %154 = vmatpush1.msra.mxu0 0.0
    %155 = vmatprep.subr.mxu0 0.0
    %156 = vmatpush1.msra.mxu0 0.0
    %157 = vmatprep.subr.mxu0 0.0
    %158 = vmatpush1.msra.mxu0 0.0
    %159 = vmatprep.subr.mxu0 0.0
    %160 = vmatpush1.msra.mxu0 0.0
    %161 = vmatprep.subr.mxu0 0.0
    %162 = vmatpush1.msra.mxu0 0.0
    %163 = vmatprep.subr.mxu0 0.0
    %164 = vmatpush1.msra.mxu0 0.0
    %165 = vmatprep.subr.mxu0 0.0
    %166 = vmatpush1.msra.mxu0 0.0
    %167 = vmatprep.subr.mxu0 0.0
    %168 = vmatpush1.msra.mxu0 0.0
    %169 = vmatprep.subr.mxu0 0.0
    %170 = vmatpush1.msra.mxu0 0.0
    %171 = vmatprep.subr.mxu0 0.0
    %172 = vmatpush1.msra.mxu0 0.0
    %173 = vmatprep.subr.mxu0 0.0
    %174 = vmatpush1.msra.mxu0 0.0
    %175 = vmatprep.subr.mxu0 0.0
    %176 = vmatpush1.msra.mxu0 0.0
    %177 = vmatprep.subr.mxu0 0.0
    %178 = vmatpush1.msra.mxu0 0.0
    %179 = vmatprep.subr.mxu0 0.0
    %180 = vmatpush1.msra.mxu0 0.0
    %181 = vmatprep.subr.mxu0 0.0
    %182 = vmatpush1.msra.mxu0 0.0
    %183 = vmatprep.mubr.f32.mxu0 0.0
    %184 = vmatmul.mubr.f32.gmra.mrb[0].mxu0 %v117
    %v185 = vpop.f32.mrb[0].mxu0
    %v186 = vadd.f32 %v108, %v185
    %v187 = vpop.f32.mrb[0].mxu0
    %v188 = vadd.f32 %v112, %v187
    %189 = vdwg.mxu0
    %vm190 = vcmp.gt.f32.partialorder %v186, 0.0
    %vm191 = vcmp.gt.f32.partialorder %v188, 0.0
    %v192 = vmin.f32 %v186, 0.0
    %v193 = vmin.f32 %v188, 0.0
    %v194 = vrcp.pop 0.06
    %v195 = vmul.f32 %v192, %v194
    %v196 = vmul.f32 %v193, %v194
    %v197 = vmul.f32 %v195, 1.442695
    %v198 = vpow.pop %v197
    %v199 = vmul.f32 %v196, 1.442695
    %v200 = vpow.pop %v199
    %v201 = vsub.f32 %v198, 1.0
    %v202 = vsub.f32 %v200, 1.0
    %v203 = vmul.f32 %v201, 0.06
    %v204 = vmul.f32 %v202, 0.06
    %v205 = vsel %vm190, %v186, %v203
    %v206 = vsel %vm191, %v188, %v204
    %v207 = vld [vmem:[#allocation2] sm:$0xff]
    %v208 = vld [vmem:[#allocation2 + $0x8] sm:$0xff]
    %v209 = vld [vmem:[#allocation2 + $0x10] sm:$0xff]
    %v210 = vld [vmem:[#allocation2 + $0x18] sm:$0xff]
    %v211 = vld [vmem:[#allocation2 + $0x20] sm:$0xff]
    %v212 = vld [vmem:[#allocation2 + $0x28] sm:$0xff]
    %v213 = vld [vmem:[#allocation2 + $0x30] sm:$0xff]
    %v214 = vld [vmem:[#allocation2 + $0x38] sm:$0xff]
    %v215 = vld [vmem:[#allocation2 + $0x40] sm:$0xff]
    %v216 = vld [vmem:[#allocation2 + $0x48] sm:$0xff]
    %v217 = vld [vmem:[#allocation2 + $0x50] sm:$0xff]
    %v218 = vld [vmem:[#allocation2 + $0x58] sm:$0xff]
    %v219 = vld [vmem:[#allocation2 + $0x60] sm:$0xff]
    %v220 = vld [vmem:[#allocation2 + $0x68] sm:$0xff]
    %v221 = vld [vmem:[#allocation2 + $0x70] sm:$0xff]
    %v222 = vld [vmem:[#allocation2 + $0x78] sm:$0xff]
    %v223 = vld [vmem:[#allocation2 + $0x80] sm:$0xff]
    %v224 = vld [vmem:[#allocation2 + $0x88] sm:$0xff]
    %v225 = vld [vmem:[#allocation2 + $0x90] sm:$0xff]
    %v226 = vld [vmem:[#allocation2 + $0x98] sm:$0xff]
    %v227 = vld [vmem:[#allocation2 + $0xa0] sm:$0xff]
    %v228 = vld [vmem:[#allocation2 + $0xa8] sm:$0xff]
    %v229 = vld [vmem:[#allocation2 + $0xb0] sm:$0xff]
    %v230 = vld [vmem:[#allocation2 + $0xb8] sm:$0xff]
    %v231 = vld [vmem:[#allocation2 + $0xc0] sm:$0xff]
    %v232 = vld [vmem:[#allocation2 + $0xc8] sm:$0xff]
    %v233 = vld [vmem:[#allocation2 + $0xd0] sm:$0xff]
    %v234 = vld [vmem:[#allocation2 + $0xd8] sm:$0xff]
    %v235 = vld [vmem:[#allocation2 + $0xe0] sm:$0xff]
    %v236 = vld [vmem:[#allocation2 + $0xe8] sm:$0xff]
    %v237 = vld [vmem:[#allocation2 + $0xf0] sm:$0xff]
    %v238 = vld [vmem:[#allocation2 + $0xf8] sm:$0xff]
    %v239 = vld [vmem:[#allocation2 + $0x100] sm:$0xff]
    %v240 = vld [vmem:[#allocation2 + $0x108] sm:$0xff]
    %v241 = vld [vmem:[#allocation2 + $0x110] sm:$0xff]
    %v242 = vld [vmem:[#allocation2 + $0x118] sm:$0xff]
    %v243 = vld [vmem:[#allocation2 + $0x120] sm:$0xff]
    %v244 = vld [vmem:[#allocation2 + $0x128] sm:$0xff]
    %v245 = vld [vmem:[#allocation2 + $0x130] sm:$0xff]
    %v246 = vld [vmem:[#allocation2 + $0x138] sm:$0xff]
    %v247 = vld [vmem:[#allocation2 + $0x140] sm:$0xff]
    %v248 = vld [vmem:[#allocation2 + $0x148] sm:$0xff]
    %v249 = vld [vmem:[#allocation2 + $0x150] sm:$0xff]
    %v250 = vld [vmem:[#allocation2 + $0x158] sm:$0xff]
    %v251 = vld [vmem:[#allocation2 + $0x160] sm:$0xff]
    %v252 = vld [vmem:[#allocation2 + $0x168] sm:$0xff]
    %v253 = vld [vmem:[#allocation2 + $0x170] sm:$0xff]
    %v254 = vld [vmem:[#allocation2 + $0x178] sm:$0xff]
    %v255 = vld [vmem:[#allocation2 + $0x180] sm:$0xff]
    %v256 = vld [vmem:[#allocation2 + $0x188] sm:$0xff]
    %v257 = vld [vmem:[#allocation2 + $0x190] sm:$0xff]
    %v258 = vld [vmem:[#allocation2 + $0x198] sm:$0xff]
    %v259 = vld [vmem:[#allocation2 + $0x1a0] sm:$0xff]
    %v260 = vld [vmem:[#allocation2 + $0x1a8] sm:$0xff]
    %v261 = vld [vmem:[#allocation2 + $0x1b0] sm:$0xff]
    %v262 = vld [vmem:[#allocation2 + $0x1b8] sm:$0xff]
    %v263 = vld [vmem:[#allocation2 + $0x1c0] sm:$0xff]
    %v264 = vld [vmem:[#allocation2 + $0x1c8] sm:$0xff]
    %v265 = vld [vmem:[#allocation2 + $0x1d0] sm:$0xff]
    %v266 = vld [vmem:[#allocation2 + $0x1d8] sm:$0xff]
    %v267 = vld [vmem:[#allocation2 + $0x1e0] sm:$0xff]
    %v268 = vld [vmem:[#allocation2 + $0x1e8] sm:$0xff]
    %v269 = vld [vmem:[#allocation2 + $0x1f0] sm:$0xff]
    %v270 = vld [vmem:[#allocation2 + $0x1f8] sm:$0xff]
    %v271 = vld [vmem:[#allocation2 + $0x200] sm:$0xff]
    %v272 = vld [vmem:[#allocation2 + $0x208] sm:$0xff]
    %v273 = vld [vmem:[#allocation2 + $0x210] sm:$0xff]
    %v274 = vld [vmem:[#allocation2 + $0x218] sm:$0xff]
    %v275 = vld [vmem:[#allocation2 + $0x220] sm:$0xff]
    %v276 = vld [vmem:[#allocation2 + $0x228] sm:$0xff]
    %v277 = vld [vmem:[#allocation2 + $0x230] sm:$0xff]
    %v278 = vld [vmem:[#allocation2 + $0x238] sm:$0xff]
    %v279 = vld [vmem:[#allocation2 + $0x240] sm:$0xff]
    %v280 = vld [vmem:[#allocation2 + $0x248] sm:$0xff]
    %v281 = vld [vmem:[#allocation2 + $0x250] sm:$0xff]
    %v282 = vld [vmem:[#allocation2 + $0x258] sm:$0xff]
    %v283 = vld [vmem:[#allocation2 + $0x260] sm:$0xff]
    %v284 = vld [vmem:[#allocation2 + $0x268] sm:$0xff]
    %v285 = vld [vmem:[#allocation2 + $0x270] sm:$0xff]
    %v286 = vld [vmem:[#allocation2 + $0x278] sm:$0xff]
    %v287 = vld [vmem:[#allocation2 + $0x280] sm:$0xff]
    %v288 = vld [vmem:[#allocation2 + $0x288] sm:$0xff]
    %v289 = vld [vmem:[#allocation2 + $0x290] sm:$0xff]
    %v290 = vld [vmem:[#allocation2 + $0x298] sm:$0xff]
    %v291 = vld [vmem:[#allocation2 + $0x2a0] sm:$0xff]
    %v292 = vld [vmem:[#allocation2 + $0x2a8] sm:$0xff]
    %v293 = vld [vmem:[#allocation2 + $0x2b0] sm:$0xff]
    %v294 = vld [vmem:[#allocation2 + $0x2b8] sm:$0xff]
    %v295 = vld [vmem:[#allocation2 + $0x2c0] sm:$0xff]
    %v296 = vld [vmem:[#allocation2 + $0x2c8] sm:$0xff]
    %v297 = vld [vmem:[#allocation2 + $0x2d0] sm:$0xff]
    %v298 = vld [vmem:[#allocation2 + $0x2d8] sm:$0xff]
    %v299 = vld [vmem:[#allocation2 + $0x2e0] sm:$0xff]
    %v300 = vld [vmem:[#allocation2 + $0x2e8] sm:$0xff]
    %v301 = vld [vmem:[#allocation2 + $0x2f0] sm:$0xff]
    %v302 = vld [vmem:[#allocation2 + $0x2f8] sm:$0xff]
    %v303 = vld [vmem:[#allocation2 + $0x300] sm:$0xff]
    %v304 = vld [vmem:[#allocation2 + $0x308] sm:$0xff]
    %v305 = vld [vmem:[#allocation2 + $0x310] sm:$0xff]
    %v306 = vld [vmem:[#allocation2 + $0x318] sm:$0xff]
    %v307 = vld [vmem:[#allocation2 + $0x320] sm:$0xff]
    %v308 = vld [vmem:[#allocation2 + $0x328] sm:$0xff]
    %v309 = vld [vmem:[#allocation2 + $0x330] sm:$0xff]
    %v310 = vld [vmem:[#allocation2 + $0x338] sm:$0xff]
    %v311 = vld [vmem:[#allocation2 + $0x340] sm:$0xff]
    %v312 = vld [vmem:[#allocation2 + $0x348] sm:$0xff]
    %v313 = vld [vmem:[#allocation2 + $0x350] sm:$0xff]
    %v314 = vld [vmem:[#allocation2 + $0x358] sm:$0xff]
    %v315 = vld [vmem:[#allocation2 + $0x360] sm:$0xff]
    %v316 = vld [vmem:[#allocation2 + $0x368] sm:$0xff]
    %v317 = vld [vmem:[#allocation2 + $0x370] sm:$0xff]
    %v318 = vld [vmem:[#allocation2 + $0x378] sm:$0xff]
    %v319 = vld [vmem:[#allocation2 + $0x380] sm:$0xff]
    %v320 = vld [vmem:[#allocation2 + $0x388] sm:$0xff]
    %v321 = vld [vmem:[#allocation2 + $0x390] sm:$0xff]
    %v322 = vld [vmem:[#allocation2 + $0x398] sm:$0xff]
    %v323 = vld [vmem:[#allocation2 + $0x3a0] sm:$0xff]
    %v324 = vld [vmem:[#allocation2 + $0x3a8] sm:$0xff]
    %v325 = vld [vmem:[#allocation2 + $0x3b0] sm:$0xff]
    %v326 = vld [vmem:[#allocation2 + $0x3b8] sm:$0xff]
    %v327 = vld [vmem:[#allocation2 + $0x3c0] sm:$0xff]
    %v328 = vld [vmem:[#allocation2 + $0x3c8] sm:$0xff]
    %v329 = vld [vmem:[#allocation2 + $0x3d0] sm:$0xff]
    %v330 = vld [vmem:[#allocation2 + $0x3d8] sm:$0xff]
    %v331 = vld [vmem:[#allocation2 + $0x3e0] sm:$0xff]
    %v332 = vld [vmem:[#allocation2 + $0x3e8] sm:$0xff]
    %v333 = vld [vmem:[#allocation2 + $0x3f0] sm:$0xff]
    %v334 = vld [vmem:[#allocation2 + $0x3f8] sm:$0xff]
    %v335 = vld [vmem:[%s4] sm:$0xf]
    %v337 = vlaneseq
    %v338 = vshrl.u32 %v337, 7
    %v339 = vsub.s32 0, %v338
    %v340 = vrot.slane %v335, %v339
    %v341 = vlaneseq
    %v342 = vshrl.u32 %v341, 7
    %v343 = vsub.s32 1, %v342
    %v344 = vrot.slane %v335, %v343
    %v345 = vlaneseq
    %v346 = vshrl.u32 %v345, 7
    %v347 = vsub.s32 2, %v346
    %v348 = vrot.slane %v335, %v347
    %v349 = vlaneseq
    %v350 = vshrl.u32 %v349, 7
    %v351 = vsub.s32 3, %v350
    %v352 = vrot.slane %v335, %v351
    %357 = vmatprep.subr.mxu0 %v208
    %358 = vmatpush1.msra.mxu0 %v207
    %359 = vmatprep.subr.mxu0 %v212
    %360 = vmatpush1.msra.mxu0 %v211
    %361 = vmatprep.subr.mxu0 %v216
    %362 = vmatpush1.msra.mxu0 %v215
    %363 = vmatprep.subr.mxu0 %v220
    %364 = vmatpush1.msra.mxu0 %v219
    %365 = vmatprep.subr.mxu0 %v224
    %366 = vmatpush1.msra.mxu0 %v223
    %367 = vmatprep.subr.mxu0 %v228
    %368 = vmatpush1.msra.mxu0 %v227
    %369 = vmatprep.subr.mxu0 %v232
    %370 = vmatpush1.msra.mxu0 %v231
    %371 = vmatprep.subr.mxu0 %v236
    %372 = vmatpush1.msra.mxu0 %v235
    %373 = vmatprep.subr.mxu0 %v240
    %374 = vmatpush1.msra.mxu0 %v239
    %375 = vmatprep.subr.mxu0 %v244
    %376 = vmatpush1.msra.mxu0 %v243
    %377 = vmatprep.subr.mxu0 %v248
    %378 = vmatpush1.msra.mxu0 %v247
    %379 = vmatprep.subr.mxu0 %v252
    %380 = vmatpush1.msra.mxu0 %v251
    %381 = vmatprep.subr.mxu0 %v256
    %382 = vmatpush1.msra.mxu0 %v255
    %383 = vmatprep.subr.mxu0 %v260
    %384 = vmatpush1.msra.mxu0 %v259
    %385 = vmatprep.subr.mxu0 %v264
    %386 = vmatpush1.msra.mxu0 %v263
    %387 = vmatprep.subr.mxu0 %v268
    %388 = vmatpush1.msra.mxu0 %v267
    %389 = vmatprep.subr.mxu0 %v272
    %390 = vmatpush1.msra.mxu0 %v271
    %391 = vmatprep.subr.mxu0 %v276
    %392 = vmatpush1.msra.mxu0 %v275
    %393 = vmatprep.subr.mxu0 %v280
    %394 = vmatpush1.msra.mxu0 %v279
    %395 = vmatprep.subr.mxu0 %v284
    %396 = vmatpush1.msra.mxu0 %v283
    %397 = vmatprep.subr.mxu0 %v288
    %398 = vmatpush1.msra.mxu0 %v287
    %399 = vmatprep.subr.mxu0 %v292
    %400 = vmatpush1.msra.mxu0 %v291
    %401 = vmatprep.subr.mxu0 %v296
    %402 = vmatpush1.msra.mxu0 %v295
    %403 = vmatprep.subr.mxu0 %v300
    %404 = vmatpush1.msra.mxu0 %v299
    %405 = vmatprep.subr.mxu0 %v304
    %406 = vmatpush1.msra.mxu0 %v303
    %407 = vmatprep.subr.mxu0 %v308
    %408 = vmatpush1.msra.mxu0 %v307
    %409 = vmatprep.subr.mxu0 %v312
    %410 = vmatpush1.msra.mxu0 %v311
    %411 = vmatprep.subr.mxu0 %v316
    %412 = vmatpush1.msra.mxu0 %v315
    %413 = vmatprep.subr.mxu0 %v320
    %414 = vmatpush1.msra.mxu0 %v319
    %415 = vmatprep.subr.mxu0 %v324
    %416 = vmatpush1.msra.mxu0 %v323
    %417 = vmatprep.subr.mxu0 %v328
    %418 = vmatpush1.msra.mxu0 %v327
    %419 = vmatprep.subr.mxu0 %v332
    %420 = vmatpush1.msra.mxu0 %v331
    %421 = vmatprep.mubr.f32.mxu0 %v206
    %422 = vmatmul.mubr.f32.gmra.mrb[0].mxu0 %v205
    %v423 = vpop.f32.mrb[0].mxu0
    %v424 = vadd.f32 %v340, %v423
    %v425 = vpop.f32.mrb[0].mxu0
    %v426 = vadd.f32 %v344, %v425
    %427 = vdwg.mxu0
    %428 = vmatprep.subr.mxu0 %v210
    %429 = vmatpush1.msra.mxu0 %v209
    %430 = vmatprep.subr.mxu0 %v214
    %431 = vmatpush1.msra.mxu0 %v213
    %432 = vmatprep.subr.mxu0 %v218
    %433 = vmatpush1.msra.mxu0 %v217
    %434 = vmatprep.subr.mxu0 %v222
    %435 = vmatpush1.msra.mxu0 %v221
    %436 = vmatprep.subr.mxu0 %v226
    %437 = vmatpush1.msra.mxu0 %v225
    %438 = vmatprep.subr.mxu0 %v230
    %439 = vmatpush1.msra.mxu0 %v229
    %440 = vmatprep.subr.mxu0 %v234
    %441 = vmatpush1.msra.mxu0 %v233
    %442 = vmatprep.subr.mxu0 %v238
    %443 = vmatpush1.msra.mxu0 %v237
    %444 = vmatprep.subr.mxu0 %v242
    %445 = vmatpush1.msra.mxu0 %v241
    %446 = vmatprep.subr.mxu0 %v246
    %447 = vmatpush1.msra.mxu0 %v245
    %448 = vmatprep.subr.mxu0 %v250
    %449 = vmatpush1.msra.mxu0 %v249
    %450 = vmatprep.subr.mxu0 %v254
    %451 = vmatpush1.msra.mxu0 %v253
    %452 = vmatprep.subr.mxu0 %v258
    %453 = vmatpush1.msra.mxu0 %v257
    %454 = vmatprep.subr.mxu0 %v262
    %455 = vmatpush1.msra.mxu0 %v261
    %456 = vmatprep.subr.mxu0 %v266
    %457 = vmatpush1.msra.mxu0 %v265
    %458 = vmatprep.subr.mxu0 %v270
    %459 = vmatpush1.msra.mxu0 %v269
    %460 = vmatprep.subr.mxu0 %v274
    %461 = vmatpush1.msra.mxu0 %v273
    %462 = vmatprep.subr.mxu0 %v278
    %463 = vmatpush1.msra.mxu0 %v277
    %464 = vmatprep.subr.mxu0 %v282
    %465 = vmatpush1.msra.mxu0 %v281
    %466 = vmatprep.subr.mxu0 %v286
    %467 = vmatpush1.msra.mxu0 %v285
    %468 = vmatprep.subr.mxu0 %v290
    %469 = vmatpush1.msra.mxu0 %v289
    %470 = vmatprep.subr.mxu0 %v294
    %471 = vmatpush1.msra.mxu0 %v293
    %472 = vmatprep.subr.mxu0 %v298
    %473 = vmatpush1.msra.mxu0 %v297
    %474 = vmatprep.subr.mxu0 %v302
    %475 = vmatpush1.msra.mxu0 %v301
    %476 = vmatprep.subr.mxu0 %v306
    %477 = vmatpush1.msra.mxu0 %v305
    %478 = vmatprep.subr.mxu0 %v310
    %479 = vmatpush1.msra.mxu0 %v309
    %480 = vmatprep.subr.mxu0 %v314
    %481 = vmatpush1.msra.mxu0 %v313
    %482 = vmatprep.subr.mxu0 %v318
    %483 = vmatpush1.msra.mxu0 %v317
    %484 = vmatprep.subr.mxu0 %v322
    %485 = vmatpush1.msra.mxu0 %v321
    %486 = vmatprep.subr.mxu0 %v326
    %487 = vmatpush1.msra.mxu0 %v325
    %488 = vmatprep.subr.mxu0 %v330
    %489 = vmatpush1.msra.mxu0 %v329
    %490 = vmatprep.subr.mxu0 %v334
    %491 = vmatpush1.msra.mxu0 %v333
    %492 = vmatprep.mubr.f32.mxu0 %v206
    %493 = vmatmul.mubr.f32.gmra.mrb[0].mxu0 %v205
    %v494 = vpop.f32.mrb[0].mxu0
    %v495 = vadd.f32 %v348, %v494
    %v496 = vpop.f32.mrb[0].mxu0
    %v497 = vadd.f32 %v352, %v496
    %498 = vdwg.mxu0
    %v499 = vmax.f32 %v424, 0.0
    %v500 = vmax.f32 %v426, 0.0
    %v501 = vmax.f32 %v495, 0.0
    %v502 = vmax.f32 %v497, 0.0
    %v503 = vld [vmem:[#allocation4] sm:$0xff]
    %v504 = vld [vmem:[#allocation4 + $0x8] sm:$0xff]
    %v505 = vld [vmem:[#allocation4 + $0x10] sm:$0xff]
    %v506 = vld [vmem:[#allocation4 + $0x18] sm:$0xff]
    %v507 = vld [vmem:[#allocation4 + $0x20] sm:$0xff]
    %v508 = vld [vmem:[#allocation4 + $0x28] sm:$0xff]
    %v509 = vld [vmem:[#allocation4 + $0x30] sm:$0xff]
    %v510 = vld [vmem:[#allocation4 + $0x38] sm:$0xff]
    %v511 = vld [vmem:[#allocation4 + $0x40] sm:$0xff]
    %v512 = vld [vmem:[#allocation4 + $0x48] sm:$0xff]
    %v513 = vld [vmem:[#allocation4 + $0x50] sm:$0xff]
    %v514 = vld [vmem:[#allocation4 + $0x58] sm:$0xff]
    %v515 = vld [vmem:[#allocation4 + $0x60] sm:$0xff]
    %v516 = vld [vmem:[#allocation4 + $0x68] sm:$0xff]
    %v517 = vld [vmem:[#allocation4 + $0x70] sm:$0xff]
    %v518 = vld [vmem:[#allocation4 + $0x78] sm:$0xff]
    %v519 = vld [vmem:[#allocation4 + $0x80] sm:$0xff]
    %v520 = vld [vmem:[#allocation4 + $0x88] sm:$0xff]
    %v521 = vld [vmem:[#allocation4 + $0x90] sm:$0xff]
    %v522 = vld [vmem:[#allocation4 + $0x98] sm:$0xff]
    %v523 = vld [vmem:[#allocation4 + $0xa0] sm:$0xff]
    %v524 = vld [vmem:[#allocation4 + $0xa8] sm:$0xff]
    %v525 = vld [vmem:[#allocation4 + $0xb0] sm:$0xff]
    %v526 = vld [vmem:[#allocation4 + $0xb8] sm:$0xff]
    %v527 = vld [vmem:[#allocation4 + $0xc0] sm:$0xff]
    %v528 = vld [vmem:[#allocation4 + $0xc8] sm:$0xff]
    %v529 = vld [vmem:[#allocation4 + $0xd0] sm:$0xff]
    %v530 = vld [vmem:[#allocation4 + $0xd8] sm:$0xff]
    %v531 = vld [vmem:[#allocation4 + $0xe0] sm:$0xff]
    %v532 = vld [vmem:[#allocation4 + $0xe8] sm:$0xff]
    %v533 = vld [vmem:[#allocation4 + $0xf0] sm:$0xff]
    %v534 = vld [vmem:[#allocation4 + $0xf8] sm:$0xff]
    %v535 = vld [vmem:[#allocation4 + $0x100] sm:$0xff]
    %v536 = vld [vmem:[#allocation4 + $0x108] sm:$0xff]
    %v537 = vld [vmem:[#allocation4 + $0x110] sm:$0xff]
    %v538 = vld [vmem:[#allocation4 + $0x118] sm:$0xff]
    %v539 = vld [vmem:[#allocation4 + $0x120] sm:$0xff]
    %v540 = vld [vmem:[#allocation4 + $0x128] sm:$0xff]
    %v541 = vld [vmem:[#allocation4 + $0x130] sm:$0xff]
    %v542 = vld [vmem:[#allocation4 + $0x138] sm:$0xff]
    %v543 = vld [vmem:[#allocation4 + $0x140] sm:$0xff]
    %v544 = vld [vmem:[#allocation4 + $0x148] sm:$0xff]
    %v545 = vld [vmem:[#allocation4 + $0x150] sm:$0xff]
    %v546 = vld [vmem:[#allocation4 + $0x158] sm:$0xff]
    %v547 = vld [vmem:[#allocation4 + $0x160] sm:$0xff]
    %v548 = vld [vmem:[#allocation4 + $0x168] sm:$0xff]
    %v549 = vld [vmem:[#allocation4 + $0x170] sm:$0xff]
    %v550 = vld [vmem:[#allocation4 + $0x178] sm:$0xff]
    %v551 = vld [vmem:[#allocation4 + $0x180] sm:$0xff]
    %v552 = vld [vmem:[#allocation4 + $0x188] sm:$0xff]
    %v553 = vld [vmem:[#allocation4 + $0x190] sm:$0xff]
    %v554 = vld [vmem:[#allocation4 + $0x198] sm:$0xff]
    %v555 = vld [vmem:[#allocation4 + $0x1a0] sm:$0xff]
    %v556 = vld [vmem:[#allocation4 + $0x1a8] sm:$0xff]
    %v557 = vld [vmem:[#allocation4 + $0x1b0] sm:$0xff]
    %v558 = vld [vmem:[#allocation4 + $0x1b8] sm:$0xff]
    %v559 = vld [vmem:[#allocation4 + $0x1c0] sm:$0xff]
    %v560 = vld [vmem:[#allocation4 + $0x1c8] sm:$0xff]
    %v561 = vld [vmem:[#allocation4 + $0x1d0] sm:$0xff]
    %v562 = vld [vmem:[#allocation4 + $0x1d8] sm:$0xff]
    %v563 = vld [vmem:[#allocation4 + $0x1e0] sm:$0xff]
    %v564 = vld [vmem:[#allocation4 + $0x1e8] sm:$0xff]
    %v565 = vld [vmem:[#allocation4 + $0x1f0] sm:$0xff]
    %v566 = vld [vmem:[#allocation4 + $0x1f8] sm:$0xff]
    %v567 = vld [vmem:[#allocation4 + $0x200] sm:$0xff]
    %v568 = vld [vmem:[#allocation4 + $0x208] sm:$0xff]
    %v569 = vld [vmem:[#allocation4 + $0x210] sm:$0xff]
    %v570 = vld [vmem:[#allocation4 + $0x218] sm:$0xff]
    %v571 = vld [vmem:[#allocation4 + $0x220] sm:$0xff]
    %v572 = vld [vmem:[#allocation4 + $0x228] sm:$0xff]
    %v573 = vld [vmem:[#allocation4 + $0x230] sm:$0xff]
    %v574 = vld [vmem:[#allocation4 + $0x238] sm:$0xff]
    %v575 = vld [vmem:[#allocation4 + $0x240] sm:$0xff]
    %v576 = vld [vmem:[#allocation4 + $0x248] sm:$0xff]
    %v577 = vld [vmem:[#allocation4 + $0x250] sm:$0xff]
    %v578 = vld [vmem:[#allocation4 + $0x258] sm:$0xff]
    %v579 = vld [vmem:[#allocation4 + $0x260] sm:$0xff]
    %v580 = vld [vmem:[#allocation4 + $0x268] sm:$0xff]
    %v581 = vld [vmem:[#allocation4 + $0x270] sm:$0xff]
    %v582 = vld [vmem:[#allocation4 + $0x278] sm:$0xff]
    %v583 = vld [vmem:[#allocation4 + $0x280] sm:$0xff]
    %v584 = vld [vmem:[#allocation4 + $0x288] sm:$0xff]
    %v585 = vld [vmem:[#allocation4 + $0x290] sm:$0xff]
    %v586 = vld [vmem:[#allocation4 + $0x298] sm:$0xff]
    %v587 = vld [vmem:[#allocation4 + $0x2a0] sm:$0xff]
    %v588 = vld [vmem:[#allocation4 + $0x2a8] sm:$0xff]
    %v589 = vld [vmem:[#allocation4 + $0x2b0] sm:$0xff]
    %v590 = vld [vmem:[#allocation4 + $0x2b8] sm:$0xff]
    %v591 = vld [vmem:[#allocation4 + $0x2c0] sm:$0xff]
    %v592 = vld [vmem:[#allocation4 + $0x2c8] sm:$0xff]
    %v593 = vld [vmem:[#allocation4 + $0x2d0] sm:$0xff]
    %v594 = vld [vmem:[#allocation4 + $0x2d8] sm:$0xff]
    %v595 = vld [vmem:[#allocation4 + $0x2e0] sm:$0xff]
    %v596 = vld [vmem:[#allocation4 + $0x2e8] sm:$0xff]
    %v597 = vld [vmem:[#allocation4 + $0x2f0] sm:$0xff]
    %v598 = vld [vmem:[#allocation4 + $0x2f8] sm:$0xff]
    %v599 = vld [vmem:[#allocation4 + $0x300] sm:$0xff]
    %v600 = vld [vmem:[#allocation4 + $0x308] sm:$0xff]
    %v601 = vld [vmem:[#allocation4 + $0x310] sm:$0xff]
    %v602 = vld [vmem:[#allocation4 + $0x318] sm:$0xff]
    %v603 = vld [vmem:[#allocation4 + $0x320] sm:$0xff]
    %v604 = vld [vmem:[#allocation4 + $0x328] sm:$0xff]
    %v605 = vld [vmem:[#allocation4 + $0x330] sm:$0xff]
    %v606 = vld [vmem:[#allocation4 + $0x338] sm:$0xff]
    %v607 = vld [vmem:[#allocation4 + $0x340] sm:$0xff]
    %v608 = vld [vmem:[#allocation4 + $0x348] sm:$0xff]
    %v609 = vld [vmem:[#allocation4 + $0x350] sm:$0xff]
    %v610 = vld [vmem:[#allocation4 + $0x358] sm:$0xff]
    %v611 = vld [vmem:[#allocation4 + $0x360] sm:$0xff]
    %v612 = vld [vmem:[#allocation4 + $0x368] sm:$0xff]
    %v613 = vld [vmem:[#allocation4 + $0x370] sm:$0xff]
    %v614 = vld [vmem:[#allocation4 + $0x378] sm:$0xff]
    %v615 = vld [vmem:[#allocation4 + $0x380] sm:$0xff]
    %v616 = vld [vmem:[#allocation4 + $0x388] sm:$0xff]
    %v617 = vld [vmem:[#allocation4 + $0x390] sm:$0xff]
    %v618 = vld [vmem:[#allocation4 + $0x398] sm:$0xff]
    %v619 = vld [vmem:[#allocation4 + $0x3a0] sm:$0xff]
    %v620 = vld [vmem:[#allocation4 + $0x3a8] sm:$0xff]
    %v621 = vld [vmem:[#allocation4 + $0x3b0] sm:$0xff]
    %v622 = vld [vmem:[#allocation4 + $0x3b8] sm:$0xff]
    %v623 = vld [vmem:[#allocation4 + $0x3c0] sm:$0xff]
    %v624 = vld [vmem:[#allocation4 + $0x3c8] sm:$0xff]
    %v625 = vld [vmem:[#allocation4 + $0x3d0] sm:$0xff]
    %v626 = vld [vmem:[#allocation4 + $0x3d8] sm:$0xff]
    %v627 = vld [vmem:[#allocation4 + $0x3e0] sm:$0xff]
    %v628 = vld [vmem:[#allocation4 + $0x3e8] sm:$0xff]
    %v629 = vld [vmem:[#allocation4 + $0x3f0] sm:$0xff]
    %v630 = vld [vmem:[#allocation4 + $0x3f8] sm:$0xff]
    %v631 = vld [vmem:[%s6] sm:$0x3]
    %v633 = vlaneseq
    %v634 = vshrl.u32 %v633, 7
    %v635 = vsub.s32 0, %v634
    %v636 = vrot.slane %v631, %v635
    %v637 = vlaneseq
    %v638 = vshrl.u32 %v637, 7
    %v639 = vsub.s32 1, %v638
    %v640 = vrot.slane %v631, %v639
    %643 = vmatprep.subr.mxu0 %v504
    %644 = vmatpush1.msra.mxu0 %v503
    %645 = vmatprep.subr.mxu0 %v506
    %646 = vmatpush1.msra.mxu0 %v505
    %647 = vmatprep.subr.mxu0 %v508
    %648 = vmatpush1.msra.mxu0 %v507
    %649 = vmatprep.subr.mxu0 %v510
    %650 = vmatpush1.msra.mxu0 %v509
    %651 = vmatprep.subr.mxu0 %v512
    %652 = vmatpush1.msra.mxu0 %v511
    %653 = vmatprep.subr.mxu0 %v514
    %654 = vmatpush1.msra.mxu0 %v513
    %655 = vmatprep.subr.mxu0 %v516
    %656 = vmatpush1.msra.mxu0 %v515
    %657 = vmatprep.subr.mxu0 %v518
    %658 = vmatpush1.msra.mxu0 %v517
    %659 = vmatprep.subr.mxu0 %v520
    %660 = vmatpush1.msra.mxu0 %v519
    %661 = vmatprep.subr.mxu0 %v522
    %662 = vmatpush1.msra.mxu0 %v521
    %663 = vmatprep.subr.mxu0 %v524
    %664 = vmatpush1.msra.mxu0 %v523
    %665 = vmatprep.subr.mxu0 %v526
    %666 = vmatpush1.msra.mxu0 %v525
    %667 = vmatprep.subr.mxu0 %v528
    %668 = vmatpush1.msra.mxu0 %v527
    %669 = vmatprep.subr.mxu0 %v530
    %670 = vmatpush1.msra.mxu0 %v529
    %671 = vmatprep.subr.mxu0 %v532
    %672 = vmatpush1.msra.mxu0 %v531
    %673 = vmatprep.subr.mxu0 %v534
    %674 = vmatpush1.msra.mxu0 %v533
    %675 = vmatprep.subr.mxu0 %v536
    %676 = vmatpush1.msra.mxu0 %v535
    %677 = vmatprep.subr.mxu0 %v538
    %678 = vmatpush1.msra.mxu0 %v537
    %679 = vmatprep.subr.mxu0 %v540
    %680 = vmatpush1.msra.mxu0 %v539
    %681 = vmatprep.subr.mxu0 %v542
    %682 = vmatpush1.msra.mxu0 %v541
    %683 = vmatprep.subr.mxu0 %v544
    %684 = vmatpush1.msra.mxu0 %v543
    %685 = vmatprep.subr.mxu0 %v546
    %686 = vmatpush1.msra.mxu0 %v545
    %687 = vmatprep.subr.mxu0 %v548
    %688 = vmatpush1.msra.mxu0 %v547
    %689 = vmatprep.subr.mxu0 %v550
    %690 = vmatpush1.msra.mxu0 %v549
    %691 = vmatprep.subr.mxu0 %v552
    %692 = vmatpush1.msra.mxu0 %v551
    %693 = vmatprep.subr.mxu0 %v554
    %694 = vmatpush1.msra.mxu0 %v553
    %695 = vmatprep.subr.mxu0 %v556
    %696 = vmatpush1.msra.mxu0 %v555
    %697 = vmatprep.subr.mxu0 %v558
    %698 = vmatpush1.msra.mxu0 %v557
    %699 = vmatprep.subr.mxu0 %v560
    %700 = vmatpush1.msra.mxu0 %v559
    %701 = vmatprep.subr.mxu0 %v562
    %702 = vmatpush1.msra.mxu0 %v561
    %703 = vmatprep.subr.mxu0 %v564
    %704 = vmatpush1.msra.mxu0 %v563
    %705 = vmatprep.subr.mxu0 %v566
    %706 = vmatpush1.msra.mxu0 %v565
    %707 = vmatprep.mubr.f32.mxu0 %v500
    %708 = vmatmul.mubr.f32.gmra.mrb[0].mxu0 %v499
    %v709 = vpop.f32.mrb[0].mxu0
    %v710 = vadd.f32 %v636, %v709
    %v711 = vpop.f32.mrb[0].mxu0
    %v712 = vadd.f32 %v640, %v711
    %713 = vdwg.mxu0
    %714 = vmatprep.subr.mxu0 %v568
    %715 = vmatpush1.msra.mxu0 %v567
    %716 = vmatprep.subr.mxu0 %v570
    %717 = vmatpush1.msra.mxu0 %v569
    %718 = vmatprep.subr.mxu0 %v572
    %719 = vmatpush1.msra.mxu0 %v571
    %720 = vmatprep.subr.mxu0 %v574
    %721 = vmatpush1.msra.mxu0 %v573
    %722 = vmatprep.subr.mxu0 %v576
    %723 = vmatpush1.msra.mxu0 %v575
    %724 = vmatprep.subr.mxu0 %v578
    %725 = vmatpush1.msra.mxu0 %v577
    %726 = vmatprep.subr.mxu0 %v580
    %727 = vmatpush1.msra.mxu0 %v579
    %728 = vmatprep.subr.mxu0 %v582
    %729 = vmatpush1.msra.mxu0 %v581
    %730 = vmatprep.subr.mxu0 %v584
    %731 = vmatpush1.msra.mxu0 %v583
    %732 = vmatprep.subr.mxu0 %v586
    %733 = vmatpush1.msra.mxu0 %v585
    %734 = vmatprep.subr.mxu0 %v588
    %735 = vmatpush1.msra.mxu0 %v587
    %736 = vmatprep.subr.mxu0 %v590
    %737 = vmatpush1.msra.mxu0 %v589
    %738 = vmatprep.subr.mxu0 %v592
    %739 = vmatpush1.msra.mxu0 %v591
    %740 = vmatprep.subr.mxu0 %v594
    %741 = vmatpush1.msra.mxu0 %v593
    %742 = vmatprep.subr.mxu0 %v596
    %743 = vmatpush1.msra.mxu0 %v595
    %744 = vmatprep.subr.mxu0 %v598
    %745 = vmatpush1.msra.mxu0 %v597
    %746 = vmatprep.subr.mxu0 %v600
    %747 = vmatpush1.msra.mxu0 %v599
    %748 = vmatprep.subr.mxu0 %v602
    %749 = vmatpush1.msra.mxu0 %v601
    %750 = vmatprep.subr.mxu0 %v604
    %751 = vmatpush1.msra.mxu0 %v603
    %752 = vmatprep.subr.mxu0 %v606
    %753 = vmatpush1.msra.mxu0 %v605
    %754 = vmatprep.subr.mxu0 %v608
    %755 = vmatpush1.msra.mxu0 %v607
    %756 = vmatprep.subr.mxu0 %v610
    %757 = vmatpush1.msra.mxu0 %v609
    %758 = vmatprep.subr.mxu0 %v612
    %759 = vmatpush1.msra.mxu0 %v611
    %760 = vmatprep.subr.mxu0 %v614
    %761 = vmatpush1.msra.mxu0 %v613
    %762 = vmatprep.subr.mxu0 %v616
    %763 = vmatpush1.msra.mxu0 %v615
    %764 = vmatprep.subr.mxu0 %v618
    %765 = vmatpush1.msra.mxu0 %v617
    %766 = vmatprep.subr.mxu0 %v620
    %767 = vmatpush1.msra.mxu0 %v619
    %768 = vmatprep.subr.mxu0 %v622
    %769 = vmatpush1.msra.mxu0 %v621
    %770 = vmatprep.subr.mxu0 %v624
    %771 = vmatpush1.msra.mxu0 %v623
    %772 = vmatprep.subr.mxu0 %v626
    %773 = vmatpush1.msra.mxu0 %v625
    %774 = vmatprep.subr.mxu0 %v628
    %775 = vmatpush1.msra.mxu0 %v627
    %776 = vmatprep.subr.mxu0 %v630
    %777 = vmatpush1.msra.mxu0 %v629
    %778 = vmatprep.mubr.f32.mxu0 %v502
    %779 = vmatmul.mubr.f32.gmra.mrb[0].mxu0 %v501
    %v780 = vpop.f32.mrb[0].mxu0
    %v781 = vadd.f32 %v710, %v780
    %v782 = vpop.f32.mrb[0].mxu0
    %v783 = vadd.f32 %v712, %v782
    %784 = vdwg.mxu0
    %v785 = vmax.f32 %v781, 0.0
    %v786 = vmax.f32 %v783, 0.0
    %v787 = vld [vmem:[%s7] sm:$0xff]
    %v788 = vld [vmem:[%s7 + $0x8] sm:$0xff]
    %v789 = vld [vmem:[%s7 + $0x10] sm:$0xff]
    %v790 = vld [vmem:[%s7 + $0x18] sm:$0xff]
    %v791 = vld [vmem:[%s7 + $0x20] sm:$0xff]
    %v792 = vld [vmem:[%s7 + $0x28] sm:$0xff]
    %v793 = vld [vmem:[%s7 + $0x30] sm:$0xff]
    %v794 = vld [vmem:[%s7 + $0x38] sm:$0xff]
    %v795 = vld [vmem:[%s7 + $0x40] sm:$0xff]
    %v796 = vld [vmem:[%s7 + $0x48] sm:$0xff]
    %v797 = vld [vmem:[%s7 + $0x50] sm:$0xff]
    %v798 = vld [vmem:[%s7 + $0x58] sm:$0xff]
    %v799 = vld [vmem:[%s7 + $0x60] sm:$0xff]
    %v800 = vld [vmem:[%s7 + $0x68] sm:$0xff]
    %v801 = vld [vmem:[%s7 + $0x70] sm:$0xff]
    %v802 = vld [vmem:[%s7 + $0x78] sm:$0xff]
    %v803 = vld [vmem:[%s7 + $0x80] sm:$0xff]
    %v804 = vld [vmem:[%s7 + $0x88] sm:$0xff]
    %v805 = vld [vmem:[%s7 + $0x90] sm:$0xff]
    %v806 = vld [vmem:[%s7 + $0x98] sm:$0xff]
    %v807 = vld [vmem:[%s7 + $0xa0] sm:$0xff]
    %v808 = vld [vmem:[%s7 + $0xa8] sm:$0xff]
    %v809 = vld [vmem:[%s7 + $0xb0] sm:$0xff]
    %v810 = vld [vmem:[%s7 + $0xb8] sm:$0xff]
    %v811 = vld [vmem:[%s7 + $0xc0] sm:$0xff]
    %v812 = vld [vmem:[%s7 + $0xc8] sm:$0xff]
    %v813 = vld [vmem:[%s7 + $0xd0] sm:$0xff]
    %v814 = vld [vmem:[%s7 + $0xd8] sm:$0xff]
    %v815 = vld [vmem:[%s7 + $0xe0] sm:$0xff]
    %v816 = vld [vmem:[%s7 + $0xe8] sm:$0xff]
    %v817 = vld [vmem:[%s7 + $0xf0] sm:$0xff]
    %v818 = vld [vmem:[%s7 + $0xf8] sm:$0xff]
    %v819 = vld [vmem:[%s7 + $0x100] sm:$0xff]
    %v820 = vld [vmem:[%s7 + $0x108] sm:$0xff]
    %v821 = vld [vmem:[%s7 + $0x110] sm:$0xff]
    %v822 = vld [vmem:[%s7 + $0x118] sm:$0xff]
    %v823 = vld [vmem:[%s7 + $0x120] sm:$0xff]
    %v824 = vld [vmem:[%s7 + $0x128] sm:$0xff]
    %v825 = vld [vmem:[%s7 + $0x130] sm:$0xff]
    %v826 = vld [vmem:[%s7 + $0x138] sm:$0xff]
    %v827 = vld [vmem:[%s7 + $0x140] sm:$0xff]
    %v828 = vld [vmem:[%s7 + $0x148] sm:$0xff]
    %v829 = vld [vmem:[%s7 + $0x150] sm:$0xff]
    %v830 = vld [vmem:[%s7 + $0x158] sm:$0xff]
    %v831 = vld [vmem:[%s7 + $0x160] sm:$0xff]
    %v832 = vld [vmem:[%s7 + $0x168] sm:$0xff]
    %v833 = vld [vmem:[%s7 + $0x170] sm:$0xff]
    %v834 = vld [vmem:[%s7 + $0x178] sm:$0xff]
    %v835 = vld [vmem:[%s7 + $0x180] sm:$0xff]
    %v836 = vld [vmem:[%s7 + $0x188] sm:$0xff]
    %v837 = vld [vmem:[%s7 + $0x190] sm:$0xff]
    %v838 = vld [vmem:[%s7 + $0x198] sm:$0xff]
    %v839 = vld [vmem:[%s7 + $0x1a0] sm:$0xff]
    %v840 = vld [vmem:[%s7 + $0x1a8] sm:$0xff]
    %v841 = vld [vmem:[%s7 + $0x1b0] sm:$0xff]
    %v842 = vld [vmem:[%s7 + $0x1b8] sm:$0xff]
    %v843 = vld [vmem:[%s7 + $0x1c0] sm:$0xff]
    %v844 = vld [vmem:[%s7 + $0x1c8] sm:$0xff]
    %v845 = vld [vmem:[%s7 + $0x1d0] sm:$0xff]
    %v846 = vld [vmem:[%s7 + $0x1d8] sm:$0xff]
    %v847 = vld [vmem:[%s7 + $0x1e0] sm:$0xff]
    %v848 = vld [vmem:[%s7 + $0x1e8] sm:$0xff]
    %v849 = vld [vmem:[%s7 + $0x1f0] sm:$0xff]
    %v850 = vld [vmem:[%s7 + $0x1f8] sm:$0xff]
    %v851 = vld [vmem:[%s8] sm:$0x3]
    %v853 = vlaneseq
    %v854 = vshrl.u32 %v853, 7
    %v855 = vsub.s32 0, %v854
    %v856 = vrot.slane %v851, %v855
    %v857 = vlaneseq
    %v858 = vshrl.u32 %v857, 7
    %v859 = vsub.s32 1, %v858
    %v860 = vrot.slane %v851, %v859
    %863 = vmatprep.subr.mxu0 %v788
    %864 = vmatpush1.msra.mxu0 %v787
    %865 = vmatprep.subr.mxu0 %v790
    %866 = vmatpush1.msra.mxu0 %v789
    %867 = vmatprep.subr.mxu0 %v792
    %868 = vmatpush1.msra.mxu0 %v791
    %869 = vmatprep.subr.mxu0 %v794
    %870 = vmatpush1.msra.mxu0 %v793
    %871 = vmatprep.subr.mxu0 %v796
    %872 = vmatpush1.msra.mxu0 %v795
    %873 = vmatprep.subr.mxu0 %v798
    %874 = vmatpush1.msra.mxu0 %v797
    %875 = vmatprep.subr.mxu0 %v800
    %876 = vmatpush1.msra.mxu0 %v799
    %877 = vmatprep.subr.mxu0 %v802
    %878 = vmatpush1.msra.mxu0 %v801
    %879 = vmatprep.subr.mxu0 %v804
    %880 = vmatpush1.msra.mxu0 %v803
    %881 = vmatprep.subr.mxu0 %v806
    %882 = vmatpush1.msra.mxu0 %v805
    %883 = vmatprep.subr.mxu0 %v808
    %884 = vmatpush1.msra.mxu0 %v807
    %885 = vmatprep.subr.mxu0 %v810
    %886 = vmatpush1.msra.mxu0 %v809
    %887 = vmatprep.subr.mxu0 %v812
    %888 = vmatpush1.msra.mxu0 %v811
    %889 = vmatprep.subr.mxu0 %v814
    %890 = vmatpush1.msra.mxu0 %v813
    %891 = vmatprep.subr.mxu0 %v816
    %892 = vmatpush1.msra.mxu0 %v815
    %893 = vmatprep.subr.mxu0 %v818
    %894 = vmatpush1.msra.mxu0 %v817
    %895 = vmatprep.subr.mxu0 %v820
    %896 = vmatpush1.msra.mxu0 %v819
    %897 = vmatprep.subr.mxu0 %v822
    %898 = vmatpush1.msra.mxu0 %v821
    %899 = vmatprep.subr.mxu0 %v824
    %900 = vmatpush1.msra.mxu0 %v823
    %901 = vmatprep.subr.mxu0 %v826
    %902 = vmatpush1.msra.mxu0 %v825
    %903 = vmatprep.subr.mxu0 %v828
    %904 = vmatpush1.msra.mxu0 %v827
    %905 = vmatprep.subr.mxu0 %v830
    %906 = vmatpush1.msra.mxu0 %v829
    %907 = vmatprep.subr.mxu0 %v832
    %908 = vmatpush1.msra.mxu0 %v831
    %909 = vmatprep.subr.mxu0 %v834
    %910 = vmatpush1.msra.mxu0 %v833
    %911 = vmatprep.subr.mxu0 %v836
    %912 = vmatpush1.msra.mxu0 %v835
    %913 = vmatprep.subr.mxu0 %v838
    %914 = vmatpush1.msra.mxu0 %v837
    %915 = vmatprep.subr.mxu0 %v840
    %916 = vmatpush1.msra.mxu0 %v839
    %917 = vmatprep.subr.mxu0 %v842
    %918 = vmatpush1.msra.mxu0 %v841
    %919 = vmatprep.subr.mxu0 %v844
    %920 = vmatpush1.msra.mxu0 %v843
    %921 = vmatprep.subr.mxu0 %v846
    %922 = vmatpush1.msra.mxu0 %v845
    %923 = vmatprep.subr.mxu0 %v848
    %924 = vmatpush1.msra.mxu0 %v847
    %925 = vmatprep.subr.mxu0 %v850
    %926 = vmatpush1.msra.mxu0 %v849
    %927 = vmatprep.mubr.f32.mxu0 %v786
    %928 = vmatmul.mubr.f32.gmra.mrb[0].mxu0 %v785
    %v929 = vpop.f32.mrb[0].mxu0
    %v930 = vadd.f32 %v856, %v929
    %v931 = vpop.f32.mrb[0].mxu0
    %v932 = vadd.f32 %v860, %v931
    %933 = vdwg.mxu0
    %v934 = vmax.f32 %v930, 0.0
    %v935 = vmax.f32 %v932, 0.0
    %v936 = vld [vmem:[#allocation6] sm:$0xff]
    %v937 = vld [vmem:[#allocation6 + $0x8] sm:$0xff]
    %v938 = vld [vmem:[#allocation6 + $0x10] sm:$0xff]
    %v939 = vld [vmem:[#allocation6 + $0x18] sm:$0xff]
    %v940 = vld [vmem:[#allocation6 + $0x20] sm:$0xff]
    %v941 = vld [vmem:[#allocation6 + $0x28] sm:$0xff]
    %v942 = vld [vmem:[#allocation6 + $0x30] sm:$0xff]
    %v943 = vld [vmem:[#allocation6 + $0x38] sm:$0xff]
    %v944 = vld [vmem:[#allocation6 + $0x40] sm:$0xff]
    %v945 = vld [vmem:[#allocation6 + $0x48] sm:$0xff]
    %v946 = vld [vmem:[#allocation6 + $0x50] sm:$0xff]
    %v947 = vld [vmem:[#allocation6 + $0x58] sm:$0xff]
    %v948 = vld [vmem:[#allocation6 + $0x60] sm:$0xff]
    %v949 = vld [vmem:[#allocation6 + $0x68] sm:$0xff]
    %v950 = vld [vmem:[#allocation6 + $0x70] sm:$0xff]
    %v951 = vld [vmem:[#allocation6 + $0x78] sm:$0xff]
    %v952 = vld [vmem:[#allocation6 + $0x80] sm:$0xff]
    %v953 = vld [vmem:[#allocation6 + $0x88] sm:$0xff]
    %v954 = vld [vmem:[#allocation6 + $0x90] sm:$0xff]
    %v955 = vld [vmem:[#allocation6 + $0x98] sm:$0xff]
    %v956 = vld [vmem:[#allocation6 + $0xa0] sm:$0xff]
    %v957 = vld [vmem:[#allocation6 + $0xa8] sm:$0xff]
    %v958 = vld [vmem:[#allocation6 + $0xb0] sm:$0xff]
    %v959 = vld [vmem:[#allocation6 + $0xb8] sm:$0xff]
    %v960 = vld [vmem:[#allocation6 + $0xc0] sm:$0xff]
    %v961 = vld [vmem:[#allocation6 + $0xc8] sm:$0xff]
    %v962 = vld [vmem:[#allocation6 + $0xd0] sm:$0xff]
    %v963 = vld [vmem:[#allocation6 + $0xd8] sm:$0xff]
    %v964 = vld [vmem:[#allocation6 + $0xe0] sm:$0xff]
    %v965 = vld [vmem:[#allocation6 + $0xe8] sm:$0xff]
    %v966 = vld [vmem:[#allocation6 + $0xf0] sm:$0xff]
    %v967 = vld [vmem:[#allocation6 + $0xf8] sm:$0xff]
    %v968 = vld [vmem:[#allocation6 + $0x100] sm:$0xff]
    %v969 = vld [vmem:[#allocation6 + $0x108] sm:$0xff]
    %v970 = vld [vmem:[#allocation6 + $0x110] sm:$0xff]
    %v971 = vld [vmem:[#allocation6 + $0x118] sm:$0xff]
    %v972 = vld [vmem:[#allocation6 + $0x120] sm:$0xff]
    %v973 = vld [vmem:[#allocation6 + $0x128] sm:$0xff]
    %v974 = vld [vmem:[#allocation6 + $0x130] sm:$0xff]
    %v975 = vld [vmem:[#allocation6 + $0x138] sm:$0xff]
    %v976 = vld [vmem:[#allocation6 + $0x140] sm:$0xff]
    %v977 = vld [vmem:[#allocation6 + $0x148] sm:$0xff]
    %v978 = vld [vmem:[#allocation6 + $0x150] sm:$0xff]
    %v979 = vld [vmem:[#allocation6 + $0x158] sm:$0xff]
    %v980 = vld [vmem:[#allocation6 + $0x160] sm:$0xff]
    %v981 = vld [vmem:[#allocation6 + $0x168] sm:$0xff]
    %v982 = vld [vmem:[#allocation6 + $0x170] sm:$0xff]
    %v983 = vld [vmem:[#allocation6 + $0x178] sm:$0xff]
    %v984 = vld [vmem:[#allocation6 + $0x180] sm:$0xff]
    %v985 = vld [vmem:[#allocation6 + $0x188] sm:$0xff]
    %v986 = vld [vmem:[#allocation6 + $0x190] sm:$0xff]
    %v987 = vld [vmem:[#allocation6 + $0x198] sm:$0xff]
    %v988 = vld [vmem:[#allocation6 + $0x1a0] sm:$0xff]
    %v989 = vld [vmem:[#allocation6 + $0x1a8] sm:$0xff]
    %v990 = vld [vmem:[#allocation6 + $0x1b0] sm:$0xff]
    %v991 = vld [vmem:[#allocation6 + $0x1b8] sm:$0xff]
    %v992 = vld [vmem:[#allocation6 + $0x1c0] sm:$0xff]
    %v993 = vld [vmem:[#allocation6 + $0x1c8] sm:$0xff]
    %v994 = vld [vmem:[#allocation6 + $0x1d0] sm:$0xff]
    %v995 = vld [vmem:[#allocation6 + $0x1d8] sm:$0xff]
    %v996 = vld [vmem:[#allocation6 + $0x1e0] sm:$0xff]
    %v997 = vld [vmem:[#allocation6 + $0x1e8] sm:$0xff]
    %v998 = vld [vmem:[#allocation6 + $0x1f0] sm:$0xff]
    %v999 = vld [vmem:[#allocation6 + $0x1f8] sm:$0xff]
    %v1000 = vld [vmem:[%s10] sm:$0x3]
    %v1002 = vlaneseq
    %v1003 = vshrl.u32 %v1002, 7
    %v1004 = vsub.s32 0, %v1003
    %v1005 = vrot.slane %v1000, %v1004
    %v1006 = vlaneseq
    %v1007 = vshrl.u32 %v1006, 7
    %v1008 = vsub.s32 1, %v1007
    %v1009 = vrot.slane %v1000, %v1008
    %1012 = vmatprep.subr.mxu0 %v937
    %1013 = vmatpush1.msra.mxu0 %v936
    %1014 = vmatprep.subr.mxu0 %v939
    %1015 = vmatpush1.msra.mxu0 %v938
    %1016 = vmatprep.subr.mxu0 %v941
    %1017 = vmatpush1.msra.mxu0 %v940
    %1018 = vmatprep.subr.mxu0 %v943
    %1019 = vmatpush1.msra.mxu0 %v942
    %1020 = vmatprep.subr.mxu0 %v945
    %1021 = vmatpush1.msra.mxu0 %v944
    %1022 = vmatprep.subr.mxu0 %v947
    %1023 = vmatpush1.msra.mxu0 %v946
    %1024 = vmatprep.subr.mxu0 %v949
    %1025 = vmatpush1.msra.mxu0 %v948
    %1026 = vmatprep.subr.mxu0 %v951
    %1027 = vmatpush1.msra.mxu0 %v950
    %1028 = vmatprep.subr.mxu0 %v953
    %1029 = vmatpush1.msra.mxu0 %v952
    %1030 = vmatprep.subr.mxu0 %v955
    %1031 = vmatpush1.msra.mxu0 %v954
    %1032 = vmatprep.subr.mxu0 %v957
    %1033 = vmatpush1.msra.mxu0 %v956
    %1034 = vmatprep.subr.mxu0 %v959
    %1035 = vmatpush1.msra.mxu0 %v958
    %1036 = vmatprep.subr.mxu0 %v961
    %1037 = vmatpush1.msra.mxu0 %v960
    %1038 = vmatprep.subr.mxu0 %v963
    %1039 = vmatpush1.msra.mxu0 %v962
    %1040 = vmatprep.subr.mxu0 %v965
    %1041 = vmatpush1.msra.mxu0 %v964
    %1042 = vmatprep.subr.mxu0 %v967
    %1043 = vmatpush1.msra.mxu0 %v966
    %1044 = vmatprep.subr.mxu0 %v969
    %1045 = vmatpush1.msra.mxu0 %v968
    %1046 = vmatprep.subr.mxu0 %v971
    %1047 = vmatpush1.msra.mxu0 %v970
    %1048 = vmatprep.subr.mxu0 %v973
    %1049 = vmatpush1.msra.mxu0 %v972
    %1050 = vmatprep.subr.mxu0 %v975
    %1051 = vmatpush1.msra.mxu0 %v974
    %1052 = vmatprep.subr.mxu0 %v977
    %1053 = vmatpush1.msra.mxu0 %v976
    %1054 = vmatprep.subr.mxu0 %v979
    %1055 = vmatpush1.msra.mxu0 %v978
    %1056 = vmatprep.subr.mxu0 %v981
    %1057 = vmatpush1.msra.mxu0 %v980
    %1058 = vmatprep.subr.mxu0 %v983
    %1059 = vmatpush1.msra.mxu0 %v982
    %1060 = vmatprep.subr.mxu0 %v985
    %1061 = vmatpush1.msra.mxu0 %v984
    %1062 = vmatprep.subr.mxu0 %v987
    %1063 = vmatpush1.msra.mxu0 %v986
    %1064 = vmatprep.subr.mxu0 %v989
    %1065 = vmatpush1.msra.mxu0 %v988
    %1066 = vmatprep.subr.mxu0 %v991
    %1067 = vmatpush1.msra.mxu0 %v990
    %1068 = vmatprep.subr.mxu0 %v993
    %1069 = vmatpush1.msra.mxu0 %v992
    %1070 = vmatprep.subr.mxu0 %v995
    %1071 = vmatpush1.msra.mxu0 %v994
    %1072 = vmatprep.subr.mxu0 %v997
    %1073 = vmatpush1.msra.mxu0 %v996
    %1074 = vmatprep.subr.mxu0 %v999
    %1075 = vmatpush1.msra.mxu0 %v998
    %1076 = vmatprep.mubr.f32.mxu0 %v935
    %1077 = vmatmul.mubr.f32.gmra.mrb[0].mxu0 %v934
    %v1078 = vpop.f32.mrb[0].mxu0
    %v1079 = vadd.f32 %v1005, %v1078
    %v1080 = vpop.f32.mrb[0].mxu0
    %v1081 = vadd.f32 %v1009, %v1080
    %1082 = vdwg.mxu0
    %v1083 = vmax.f32 %v1079, 0.0
    %v1084 = vmax.f32 %v1081, 0.0
    %v1085 = vmul.f32 %v1083, %v785
    %v1086 = vmul.f32 %v1084, %v786
    %1087 = vrot.lane.b32.xlu0 %v1085, 1
    %v1088 = vpop.permute.xlu0 %1087
    %1089 = vrot.lane.b32.xlu0 %v1086, 1
    %v1090 = vpop.permute.xlu0 %1089
    %v1091 = vlaneseq
    %v1092 = vand.u32 %v1091, 127
    %vm1093 = vcmp.lt.s32.totalorder %v1092, 1
    %v1094 = vsel %vm1093, %v1088, %v1090
    %v1095 = vsel %vm1093, %v1090, %v1088
    %v1096 = vld [vmem:[%s11] sm:$0x3]
    %v1098 = vlaneseq
    %v1099 = vshrl.u32 %v1098, 7
    %v1100 = vsub.s32 0, %v1099
    %v1101 = vrot.slane %v1096, %v1100
    %v1102 = vlaneseq
    %v1103 = vshrl.u32 %v1102, 7
    %v1104 = vsub.s32 1, %v1103
    %v1105 = vrot.slane %v1096, %v1104
    %v1108 = vmul.f32 %v1095, %v1101
    %v1109 = vmul.f32 %v1094, %v1105
    %v1110 = vmax.f32 %v1085, %v1108
    %v1111 = vmax.f32 %v1086, %v1109
    %1112 = vrot.lane.b32.xlu0 %v1085, 127
    %v1113 = vpop.permute.xlu0 %1112
    %1114 = vrot.lane.b32.xlu0 %v1086, 127
    %v1115 = vpop.permute.xlu0 %1114
    %vm1116 = vcmp.lt.s32.totalorder %v1092, 127
    %v1117 = vsel %vm1116, %v1113, %v1115
    %v1118 = vsel %vm1116, %v1115, %v1113
    %v1119 = vld [vmem:[%s12] sm:$0x3]
    %v1121 = vlaneseq
    %v1122 = vshrl.u32 %v1121, 7
    %v1123 = vsub.s32 0, %v1122
    %v1124 = vrot.slane %v1119, %v1123
    %v1125 = vlaneseq
    %v1126 = vshrl.u32 %v1125, 7
    %v1127 = vsub.s32 1, %v1126
    %v1128 = vrot.slane %v1119, %v1127
    %v1131 = vmul.f32 %v1117, %v1124
    %v1132 = vmul.f32 %v1118, %v1128
    %v1133 = vmax.f32 %v1110, %v1131
    %v1134 = vmax.f32 %v1111, %v1132
    %1135 = vrot.lane.b32.xlu0 %v1085, 126
    %v1136 = vpop.permute.xlu0 %1135
    %1137 = vrot.lane.b32.xlu0 %v1086, 126
    %v1138 = vpop.permute.xlu0 %1137
    %vm1139 = vcmp.lt.s32.totalorder %v1092, 126
    %v1140 = vsel %vm1139, %v1136, %v1138
    %v1141 = vsel %vm1139, %v1138, %v1136
    %v1142 = vld [vmem:[%s13] sm:$0x3]
    %v1144 = vlaneseq
    %v1145 = vshrl.u32 %v1144, 7
    %v1146 = vsub.s32 0, %v1145
    %v1147 = vrot.slane %v1142, %v1146
    %v1148 = vlaneseq
    %v1149 = vshrl.u32 %v1148, 7
    %v1150 = vsub.s32 1, %v1149
    %v1151 = vrot.slane %v1142, %v1150
    %v1154 = vmul.f32 %v1140, %v1147
    %v1155 = vmul.f32 %v1141, %v1151
    %v1156 = vmax.f32 %v1133, %v1154
    %v1157 = vmax.f32 %v1134, %v1155
    %v1158 = vld [vmem:[%s14] sm:$0xff]
    %v1159 = vld [vmem:[%s14 + $0x8] sm:$0xff]
    %v1160 = vld [vmem:[%s14 + $0x10] sm:$0xff]
    %v1161 = vld [vmem:[%s14 + $0x18] sm:$0xff]
    %v1162 = vld [vmem:[%s14 + $0x20] sm:$0xff]
    %v1163 = vld [vmem:[%s14 + $0x28] sm:$0xff]
    %v1164 = vld [vmem:[%s14 + $0x30] sm:$0xff]
    %v1165 = vld [vmem:[%s14 + $0x38] sm:$0xff]
    %v1166 = vld [vmem:[%s14 + $0x40] sm:$0xff]
    %v1167 = vld [vmem:[%s14 + $0x48] sm:$0xff]
    %v1168 = vld [vmem:[%s14 + $0x50] sm:$0xff]
    %v1169 = vld [vmem:[%s14 + $0x58] sm:$0xff]
    %v1170 = vld [vmem:[%s14 + $0x60] sm:$0xff]
    %v1171 = vld [vmem:[%s14 + $0x68] sm:$0xff]
    %v1172 = vld [vmem:[%s14 + $0x70] sm:$0xff]
    %v1173 = vld [vmem:[%s14 + $0x78] sm:$0xff]
    %v1174 = vld [vmem:[%s14 + $0x80] sm:$0xff]
    %v1175 = vld [vmem:[%s14 + $0x88] sm:$0xff]
    %v1176 = vld [vmem:[%s14 + $0x90] sm:$0xff]
    %v1177 = vld [vmem:[%s14 + $0x98] sm:$0xff]
    %v1178 = vld [vmem:[%s14 + $0xa0] sm:$0xff]
    %v1179 = vld [vmem:[%s14 + $0xa8] sm:$0xff]
    %v1180 = vld [vmem:[%s14 + $0xb0] sm:$0xff]
    %v1181 = vld [vmem:[%s14 + $0xb8] sm:$0xff]
    %v1182 = vld [vmem:[%s14 + $0xc0] sm:$0xff]
    %v1183 = vld [vmem:[%s14 + $0xc8] sm:$0xff]
    %v1184 = vld [vmem:[%s14 + $0xd0] sm:$0xff]
    %v1185 = vld [vmem:[%s14 + $0xd8] sm:$0xff]
    %v1186 = vld [vmem:[%s14 + $0xe0] sm:$0xff]
    %v1187 = vld [vmem:[%s14 + $0xe8] sm:$0xff]
    %v1188 = vld [vmem:[%s14 + $0xf0] sm:$0xff]
    %v1189 = vld [vmem:[%s14 + $0xf8] sm:$0xff]
    %v1190 = vld [vmem:[%s15] sm:$0x1]
    %v1192 = vlaneseq
    %v1193 = vshrl.u32 %v1192, 7
    %v1194 = vsub.s32 0, %v1193
    %v1195 = vrot.slane %v1190, %v1194
    %1197 = vmatprep.subr.mxu0 0.0
    %1198 = vmatpush1.msra.mxu0 %v1158
    %1199 = vmatprep.subr.mxu0 0.0
    %1200 = vmatpush1.msra.mxu0 %v1159
    %1201 = vmatprep.subr.mxu0 0.0
    %1202 = vmatpush1.msra.mxu0 %v1160
    %1203 = vmatprep.subr.mxu0 0.0
    %1204 = vmatpush1.msra.mxu0 %v1161
    %1205 = vmatprep.subr.mxu0 0.0
    %1206 = vmatpush1.msra.mxu0 %v1162
    %1207 = vmatprep.subr.mxu0 0.0
    %1208 = vmatpush1.msra.mxu0 %v1163
    %1209 = vmatprep.subr.mxu0 0.0
    %1210 = vmatpush1.msra.mxu0 %v1164
    %1211 = vmatprep.subr.mxu0 0.0
    %1212 = vmatpush1.msra.mxu0 %v1165
    %1213 = vmatprep.subr.mxu0 0.0
    %1214 = vmatpush1.msra.mxu0 %v1166
    %1215 = vmatprep.subr.mxu0 0.0
    %1216 = vmatpush1.msra.mxu0 %v1167
    %1217 = vmatprep.subr.mxu0 0.0
    %1218 = vmatpush1.msra.mxu0 %v1168
    %1219 = vmatprep.subr.mxu0 0.0
    %1220 = vmatpush1.msra.mxu0 %v1169
    %1221 = vmatprep.subr.mxu0 0.0
    %1222 = vmatpush1.msra.mxu0 %v1170
    %1223 = vmatprep.subr.mxu0 0.0
    %1224 = vmatpush1.msra.mxu0 %v1171
    %1225 = vmatprep.subr.mxu0 0.0
    %1226 = vmatpush1.msra.mxu0 %v1172
    %1227 = vmatprep.subr.mxu0 0.0
    %1228 = vmatpush1.msra.mxu0 %v1173
    %1229 = vmatprep.subr.mxu0 0.0
    %1230 = vmatpush1.msra.mxu0 %v1174
    %1231 = vmatprep.subr.mxu0 0.0
    %1232 = vmatpush1.msra.mxu0 %v1175
    %1233 = vmatprep.subr.mxu0 0.0
    %1234 = vmatpush1.msra.mxu0 %v1176
    %1235 = vmatprep.subr.mxu0 0.0
    %1236 = vmatpush1.msra.mxu0 %v1177
    %1237 = vmatprep.subr.mxu0 0.0
    %1238 = vmatpush1.msra.mxu0 %v1178
    %1239 = vmatprep.subr.mxu0 0.0
    %1240 = vmatpush1.msra.mxu0 %v1179
    %1241 = vmatprep.subr.mxu0 0.0
    %1242 = vmatpush1.msra.mxu0 %v1180
    %1243 = vmatprep.subr.mxu0 0.0
    %1244 = vmatpush1.msra.mxu0 %v1181
    %1245 = vmatprep.subr.mxu0 0.0
    %1246 = vmatpush1.msra.mxu0 %v1182
    %1247 = vmatprep.subr.mxu0 0.0
    %1248 = vmatpush1.msra.mxu0 %v1183
    %1249 = vmatprep.subr.mxu0 0.0
    %1250 = vmatpush1.msra.mxu0 %v1184
    %1251 = vmatprep.subr.mxu0 0.0
    %1252 = vmatpush1.msra.mxu0 %v1185
    %1253 = vmatprep.subr.mxu0 0.0
    %1254 = vmatpush1.msra.mxu0 %v1186
    %1255 = vmatprep.subr.mxu0 0.0
    %1256 = vmatpush1.msra.mxu0 %v1187
    %1257 = vmatprep.subr.mxu0 0.0
    %1258 = vmatpush1.msra.mxu0 %v1188
    %1259 = vmatprep.subr.mxu0 0.0
    %1260 = vmatpush1.msra.mxu0 %v1189
    %1261 = vmatprep.mubr.f32.mxu0 %v1157
    %1262 = vmatmul.mubr.f32.gmra.mrb[0].mxu0 %v1156
    %v1263 = vpop.f32.mrb[0].mxu0
    %v1264 = vadd.f32 %v1195, %v1263
    %v1265 = vpop.f32.mrb[0].mxu0
    %1266 = vdwg.mxu0
    %vm1267 = vcmask 31744
    %1268 = vst.msk [vmem:[%s16] sm:$0xff] %vm1267, %v1264
    // Predicated region
    $region78: #{cnn_forward_pallas.1} parent=1 // pred_check
      _
    $region79: #{cnn_forward_pallas.1} parent=1 // pred_check_branch
      %1270 = sbr.rel (0) target = $region81
    $region80: #{cnn_forward_pallas.1} parent=1 // pred_region
      _
    $region81: #{cnn_forward_pallas.1} parent=1 // pred_fallthru
      _
    // Predicated region
    $region82: #{cnn_forward_pallas.1} parent=1 // pred_check
      _
    $region83: #{cnn_forward_pallas.1} parent=1 // pred_check_branch
      %1272 = sbr.rel (0) target = $region85
    $region84: #{cnn_forward_pallas.1} parent=1 // pred_region
      _
    $region85: #{cnn_forward_pallas.1} parent=1 // pred_fallthru
      _
    %1273 = vsyncpa [#allocation3], 1
    %1274 = vsyncpa [#allocation5], 1

</llo_original>
